<compile_context>
chip_gen: v6e
topology: v6e:2x2x1
jax: 0.10.0
libtpu: 0.0.40
codegen_flags: <defaults>
</compile_context>

<pallas_src>
import jax
import jax.numpy as jnp
from jax.experimental import pallas as pl
from jax.experimental.pallas import tpu as pltpu


def fire_encoder_kernel(x_ref, pos_ref, lvl_ref, o_ref):
    # x_ref:   (TN, D) float32   -- TN flattened samples
    # pos_ref: (D, F)  bfloat16  -- Random (position) hypervectors, +/-1
    # lvl_ref: (L, F)  float32   -- Level (value) hypervectors, +/-1
    # o_ref:   (TN, F) float32
    TN, D = x_ref.shape
    L = lvl_ref.shape[0]
    F = pos_ref.shape[1]

    x = x_ref[...]                                              # (TN, D)
    # trunc-toward-zero == .long() for x >= 0; clamp guards x == 1.0 exactly.
    idx = jnp.clip((x * (L - 1)).astype(jnp.int32), 0, L - 1)   # (TN, D)

    # One-hot over levels, built once per block: onehot[n, l, d] = (idx[n, d] == l).
    lane = jax.lax.broadcasted_iota(jnp.int32, (TN, L, D), 1)   # value l along axis 1
    onehot = (idx[:, None, :] == lane).astype(jnp.bfloat16)     # (TN, L, D)
    onehot = onehot.reshape(TN * L, D)                          # merge sublane dims (cheap)

    # Embedding gather as one big MXU matmul (M = TN*L):
    #   s[n*L + l, f] = sum_d onehot[n, l, d] * pos[d, f]
    s = jnp.dot(onehot, pos_ref[...],
                preferred_element_type=jnp.float32)             # (TN*L, F), exact integers
    s = s.reshape(TN, L, F)

    # bind + multiset on the VPU (L=8 is too small for the MXU):
    #   acc[n, f] = sum_l level[l, f] * s[n, l, f]
    acc = jnp.sum(lvl_ref[...][None, :, :] * s, axis=1)         # (TN, F)

    # hard_quantize: where(>0, +1, -1)
    o_ref[...] = jnp.where(acc > 0, 1.0, -1.0).astype(o_ref.dtype)


def fire_encoder(x_nchw, position, level, *, tn=16):
    """x_nchw: (N, 3, size, size); position: (D, F) +/-1; level: (L, F) +/-1."""
    N = x_nchw.shape[0]
    D, F = position.shape
    L = level.shape[0]

    x_flat = x_nchw.reshape(N, D).astype(jnp.float32)

    # Pad batch to a multiple of tn so every grid step is a full (tn, D) block.
    # Padded rows are zeros -> idx 0 -> valid compute, sliced off below.
    n_pad = (-N) % tn
    if n_pad:
        x_flat = jnp.pad(x_flat, ((0, n_pad), (0, 0)))
    n_steps = x_flat.shape[0] // tn

    pos_bf16 = position.astype(jnp.bfloat16)   # {-1,+1} exact in bf16
    lvl_f32 = level.astype(jnp.float32)

    out = pl.pallas_call(
        fire_encoder_kernel,
        out_shape=jax.ShapeDtypeStruct((x_flat.shape[0], F), jnp.float32),
        grid=(n_steps,),
        in_specs=[
            pl.BlockSpec((tn, D), lambda n: (n, 0)),   # tn samples per grid step
            pl.BlockSpec((D, F), lambda n: (0, 0)),    # full position table (constant block)
            pl.BlockSpec((L, F), lambda n: (0, 0)),    # full level table (constant block)
        ],
        out_specs=pl.BlockSpec((tn, F), lambda n: (n, 0)),
        compiler_params=pltpu.CompilerParams(
            dimension_semantics=("parallel",)),
    )(x_flat, pos_bf16, lvl_f32)

    return out[:N]


def init_params(key, size, out_features, levels):
    """Deterministic synthetic init matching torchhd embedding shapes/semantics."""
    D = size * size * 3
    k_pos, k_lo, k_hi, k_u = jax.random.split(key, 4)

    # embeddings.Random(D, F): random bipolar {-1, +1} hypervectors
    position = jnp.where(
        jax.random.bernoulli(k_pos, 0.5, (D, out_features)), 1.0, -1.0
    ).astype(jnp.float32)

    # embeddings.Level(L, F): interpolate between two random bipolar endpoints;
    # level i copies a ~i/(L-1) fraction of dims from the "high" endpoint.
    lo = jnp.where(jax.random.bernoulli(k_lo, 0.5, (out_features,)), 1.0, -1.0)
    hi = jnp.where(jax.random.bernoulli(k_hi, 0.5, (out_features,)), 1.0, -1.0)
    u = jax.random.uniform(k_u, (out_features,))
    t = jnp.arange(levels, dtype=jnp.float32)[:, None] / (levels - 1)   # (L, 1)
    level = jnp.where(u[None, :] < t, hi[None, :], lo[None, :]).astype(jnp.float32)

    return position, level


def fire_encoder_ref(x_nchw, position, level):
    """Pure-JAX reference (gather -> bind -> multiset -> hard_quantize)."""
    N = x_nchw.shape[0]
    D = position.shape[0]
    L = level.shape[0]
    x = x_nchw.reshape(N, D).astype(jnp.float32)
    idx = jnp.clip((x * (L - 1)).astype(jnp.int32), 0, L - 1)
    value_hv = level[idx]                       # (N, D, F)
    bound = position[None, :, :] * value_hv     # bind
    multiset = bound.sum(axis=1)                # (N, F)
    return jnp.where(multiset > 0, 1.0, -1.0)


if __name__ == "__main__":
    # Small shapes consistent with the module: N=2, C=3 (size*size*3), size=16.
    N, size, out_features, levels = 2, 16, 256, 8

    key = jax.random.PRNGKey(0)
    k_x, k_params = jax.random.split(key)
    x = jax.random.uniform(k_x, (N, 3, size, size), dtype=jnp.float32)  # values in [0, 1)
    position, level = init_params(k_params, size, out_features, levels)

    out = fire_encoder(x, position, level)
    out = jax.block_until_ready(out)

    ref = fire_encoder_ref(x, position, level)
    assert out.shape == (N, out_features)
    assert bool(jnp.all(out == ref))

    print("KERNEL_OK")
</pallas_src>

<mosaic_0001>
module attributes {stable_mosaic.version = 11 : i64} {
  func.func @fire_encoder_kernel(%arg0: i32, %arg1: memref<16x768xf32, #tpu.memory_space<vmem>>, %arg2: memref<768x256xbf16, #tpu.memory_space<vmem>>, %arg3: memref<8x256xf32, #tpu.memory_space<vmem>>, %arg4: memref<16x256xf32, #tpu.memory_space<vmem>>) attributes {dimension_semantics = [#tpu.dimension_semantics<parallel>], iteration_bounds = array<i64: 1>, scalar_prefetch = 0 : i64, scratch_operands = 0 : i64, tpu.core_type = #tpu.core_type<tc>, window_params = [{transform_indices = @transform_0, window_bounds = array<i64: 16, 768>}, {pipeline_mode = #tpu.pipeline_mode<synchronous>, transform_indices = @transform_1, window_bounds = array<i64: 768, 256>}, {pipeline_mode = #tpu.pipeline_mode<synchronous>, transform_indices = @transform_2, window_bounds = array<i64: 8, 256>}, {transform_indices = @transform_3, window_bounds = array<i64: 16, 256>}]} {
    %c0 = arith.constant 0 : index
    %c0_0 = arith.constant 0 : index
    %0 = vector.load %arg1[%c0, %c0_0] : memref<16x768xf32, #tpu.memory_space<vmem>>, vector<16x768xf32>
    %cst = arith.constant 7.000000e+00 : f32
    %1 = vector.broadcast %cst : f32 to vector<16x768xf32>
    %2 = arith.mulf %0, %1 : vector<16x768xf32>
    %3 = arith.fptosi %2 : vector<16x768xf32> to vector<16x768xi32>
    %c0_i32 = arith.constant 0 : i32
    %c7_i32 = arith.constant 7 : i32
    %4 = vector.broadcast %c0_i32 : i32 to vector<16x768xi32>
    %5 = arith.maxsi %4, %3 : vector<16x768xi32>
    %6 = vector.broadcast %c7_i32 : i32 to vector<16x768xi32>
    %7 = arith.minsi %6, %5 : vector<16x768xi32>
    %8 = tpu.iota {dimensions = array<i32: 1>} : vector<16x8x768xi32>
    %9 = vector.shape_cast %7 : vector<16x768xi32> to vector<16x1x768xi32>
    %10 = vector.broadcast %9 : vector<16x1x768xi32> to vector<16x8x768xi32>
    %11 = arith.cmpi eq, %10, %8 : vector<16x8x768xi32>
    %12 = arith.extui %11 : vector<16x8x768xi1> to vector<16x8x768xi32>
    %13 = arith.sitofp %12 : vector<16x8x768xi32> to vector<16x8x768xf32>
    %14 = arith.truncf %13 : vector<16x8x768xf32> to vector<16x8x768xbf16>
    %15 = vector.shape_cast %14 : vector<16x8x768xbf16> to vector<128x768xbf16>
    %c0_1 = arith.constant 0 : index
    %c0_2 = arith.constant 0 : index
    %16 = vector.load %arg2[%c0_1, %c0_2] : memref<768x256xbf16, #tpu.memory_space<vmem>>, vector<768x256xbf16>
    %cst_3 = arith.constant dense<0.000000e+00> : vector<128x256xf32>
    %17 = tpu.matmul %15, %16, %cst_3 {dimension_numbers = #tpu.dot_dimension_numbers<[1], [0], [0], [1], [0, 0, 1, 1], [], []>} : vector<128x768xbf16>, vector<768x256xbf16>, vector<128x256xf32> -> vector<128x256xf32>
    %18 = vector.shape_cast %17 : vector<128x256xf32> to vector<16x8x256xf32>
    %c0_4 = arith.constant 0 : index
    %c0_5 = arith.constant 0 : index
    %19 = vector.load %arg3[%c0_4, %c0_5] : memref<8x256xf32, #tpu.memory_space<vmem>>, vector<8x256xf32>
    %20 = vector.shape_cast %19 : vector<8x256xf32> to vector<1x8x256xf32>
    %21 = vector.broadcast %20 : vector<1x8x256xf32> to vector<16x8x256xf32>
    %22 = arith.mulf %21, %18 : vector<16x8x256xf32>
    %cst_6 = arith.constant dense<0.000000e+00> : vector<16x256xf32>
    %23 = vector.multi_reduction <add>, %22, %cst_6 [1] : vector<16x8x256xf32> to vector<16x256xf32>
    %cst_7 = arith.constant 0.000000e+00 : f32
    %24 = vector.broadcast %cst_7 : f32 to vector<16x256xf32>
    %25 = arith.cmpf ogt, %23, %24 : vector<16x256xf32>
    %cst_8 = arith.constant 1.000000e+00 : f32
    %cst_9 = arith.constant -1.000000e+00 : f32
    %26 = vector.broadcast %cst_8 : f32 to vector<16x256xf32>
    %27 = vector.broadcast %cst_9 : f32 to vector<16x256xf32>
    %28 = arith.select %25, %26, %27 : vector<16x256xi1>, vector<16x256xf32>
    %c0_10 = arith.constant 0 : index
    %c0_11 = arith.constant 0 : index
    %29 = vector.load %arg4[%c0_10, %c0_11] : memref<16x256xf32, #tpu.memory_space<vmem>>, vector<16x256xf32>
    tpu.vector_store %arg4[%c0_10, %c0_11], %28 {strides = array<i32>} : memref<16x256xf32, #tpu.memory_space<vmem>>, vector<16x256xf32>,
    return
  }
  func.func @transform_0(%arg0: i32) -> (i32, i32) {
    %c0_i32 = arith.constant 0 : i32
    %c0_i32_0 = arith.constant 0 : i32
    return %arg0, %c0_i32 : i32, i32
  }
  func.func @transform_1(%arg0: i32) -> (i32, i32) {
    %c0_i32 = arith.constant 0 : i32
    %c0_i32_0 = arith.constant 0 : i32
    %c0_i32_1 = arith.constant 0 : i32
    return %c0_i32, %c0_i32_0 : i32, i32
  }
  func.func @transform_2(%arg0: i32) -> (i32, i32) {
    %c0_i32 = arith.constant 0 : i32
    %c0_i32_0 = arith.constant 0 : i32
    %c0_i32_1 = arith.constant 0 : i32
    return %c0_i32, %c0_i32_0 : i32, i32
  }
  func.func @transform_3(%arg0: i32) -> (i32, i32) {
    %c0_i32 = arith.constant 0 : i32
    %c0_i32_0 = arith.constant 0 : i32
    return %arg0, %c0_i32 : i32, i32
  }
}

</mosaic_0001>

<llo_original>
// kernel: tpu_custom_call.1
$region0: #{tpu_custom_call.1}
  #allocation0 [shape = 'u32[]', space=smem, size = 0x4, offset = 0x4, fixed_abs, tag = 'smem constant byte address 0x4 - core index']
  #allocation1 [shape = 'u32[144,128]{1,0:T(1,128)}', space=vmem, size = 0x12000, scoped, tag = 'internal scratch']
  %s0 = inlined_call_operand.hbm [shape: f32[16,768], index: 0, kind: input, shape index: {}]
  %s1 = inlined_call_operand.hbm [shape: bf16[768,256], index: 1, kind: input, shape index: {}]
  %s2 = inlined_call_operand.hbm [shape: f32[8,256], index: 2, kind: input, shape index: {}]
  %s3 = inlined_call_operand.hbm [shape: f32[16,256], index: 3, kind: output, shape index: {}]
  %s4 = sld [smem:[#allocation0]]
  $region34: #{tpu_custom_call.1} parent=0
    _
  %s6 = ssub.s32 1, %s4
  %s7 = scalar_select 0, %s6, %s4
  $region1: #{tpu_custom_call.1} parent=0
    #allocation2 [shape = 'u8[49152]{0}', space=vmem, size = 0xc000, scoped, tag = 'input window, operand 0, single buffered']
    #allocation3 [shape = 's32[1]{0}', space=sflag, size = 0x4, scoped, tag = 'scoped memory for tpu_custom_call.1']
    #allocation4 [shape = 's32[1]{0}', space=sflag, size = 0x4, scoped, tag = 'scoped memory for tpu_custom_call.1']
    #allocation5 [shape = 'u8[393216]{0}', space=vmem, size = 0x60000, scoped, tag = 'input window, operand 1, single buffered']
    #allocation6 [shape = 's32[1]{0}', space=sflag, size = 0x4, scoped, tag = 'scoped memory for tpu_custom_call.1']
    #allocation7 [shape = 'u8[8192]{0}', space=vmem, size = 0x2000, scoped, tag = 'input window, operand 2, single buffered']
    #allocation8 [shape = 'u8[16384]{0}', space=vmem, size = 0x4000, scoped, tag = 'output window, operand 0, single buffered']
    %8 = vsyncpa [#allocation3], 0
    %9 = vsyncpa [#allocation6], 0
    %10 = vsyncpa [#allocation4], 0
    // Predicated region
    $region2: #{tpu_custom_call.1} parent=1 // pred_check
      _
    $region3: #{tpu_custom_call.1} parent=1 // pred_check_branch
      %12 = sbr.rel (0) target = $region5
    $region4: #{tpu_custom_call.1} parent=1 // pred_region
      %s14 = ssub.s32 1536, 1536
      %15 = vsyncadd [#allocation3], %s14
      %s16 = sshll.u32 [#allocation2], 4
      %s17 = int_to_ptr.vmem [resolvable:$true] %s16
      %22 = dma.hbm_to_vmem [thread:$0]  %s0, 1536, %s17, [#allocation3], 768, 768, 48
    $region5: #{tpu_custom_call.1} parent=1 // pred_fallthru
      _
    // Predicated region
    $region6: #{tpu_custom_call.1} parent=1 // pred_check
      _
    $region7: #{tpu_custom_call.1} parent=1 // pred_check_branch
      %24 = sbr.rel (0) target = $region9
    $region8: #{tpu_custom_call.1} parent=1 // pred_region
      %s26 = ssub.s32 12288, 12288
      %27 = vsyncadd [#allocation6], %s26
      %s28 = sshll.u32 [#allocation5], 4
      %s29 = int_to_ptr.vmem [resolvable:$true] %s28
      %34 = dma.hbm_to_vmem [thread:$0]  %s1, 12288, %s29, [#allocation6], 128, 128, 8
    $region9: #{tpu_custom_call.1} parent=1 // pred_fallthru
      _
    // Predicated region
    $region10: #{tpu_custom_call.1} parent=1 // pred_check
      _
    $region11: #{tpu_custom_call.1} parent=1 // pred_check_branch
      %36 = sbr.rel (0) target = $region13
    $region12: #{tpu_custom_call.1} parent=1 // pred_region
      %s38 = ssub.s32 256, 256
      %39 = vsyncadd [#allocation6], %s38
      %s41 = sshll.u32 [#allocation7], 4
      %s42 = int_to_ptr.vmem [resolvable:$true] %s41
      %44 = dma.hbm_to_vmem [thread:$0]  %s2, 256, %s42, [#allocation6]
    $region13: #{tpu_custom_call.1} parent=1 // pred_fallthru
      _
    // Predicated region
    $region14: #{tpu_custom_call.1} parent=1 // pred_check
      _
    $region15: #{tpu_custom_call.1} parent=1 // pred_check_branch
      %46 = sbr.rel (0) target = $region17
    $region16: #{tpu_custom_call.1} parent=1 // pred_region
      %47 = dma.done [#allocation3], 1536
    $region17: #{tpu_custom_call.1} parent=1 // pred_fallthru
      _
    // Predicated region
    $region18: #{tpu_custom_call.1} parent=1 // pred_check
      _
    $region19: #{tpu_custom_call.1} parent=1 // pred_check_branch
      %49 = sbr.rel (0) target = $region21
    $region20: #{tpu_custom_call.1} parent=1 // pred_region
      %50 = dma.done [#allocation6], 12288
    $region21: #{tpu_custom_call.1} parent=1 // pred_fallthru
      _
    // Predicated region
    $region22: #{tpu_custom_call.1} parent=1 // pred_check
      _
    $region23: #{tpu_custom_call.1} parent=1 // pred_check_branch
      %52 = sbr.rel (0) target = $region25
    $region24: #{tpu_custom_call.1} parent=1 // pred_region
      %53 = dma.done [#allocation6], 256
    $region25: #{tpu_custom_call.1} parent=1 // pred_fallthru
      _
    %v54 = vld [vmem:[#allocation2] sm:$0xff]
    %v55 = vld [vmem:[#allocation2 + $0x8] sm:$0xff]
    %v56 = vld [vmem:[#allocation2 + $0x10] sm:$0xff]
    %v57 = vld [vmem:[#allocation2 + $0x18] sm:$0xff]
    %v58 = vld [vmem:[#allocation2 + $0x20] sm:$0xff]
    %v59 = vld [vmem:[#allocation2 + $0x28] sm:$0xff]
    %v60 = vld [vmem:[#allocation2 + $0x30] sm:$0xff]
    %v61 = vld [vmem:[#allocation2 + $0x38] sm:$0xff]
    %v62 = vld [vmem:[#allocation2 + $0x40] sm:$0xff]
    %v63 = vld [vmem:[#allocation2 + $0x48] sm:$0xff]
    %v64 = vld [vmem:[#allocation2 + $0x50] sm:$0xff]
    %v65 = vld [vmem:[#allocation2 + $0x58] sm:$0xff]
    %v66 = vmul.f32 %v54, 7.0
    %v67 = vmul.f32 %v55, 7.0
    %v68 = vmul.f32 %v56, 7.0
    %v69 = vmul.f32 %v57, 7.0
    %v70 = vmul.f32 %v58, 7.0
    %v71 = vmul.f32 %v59, 7.0
    %v72 = vmul.f32 %v60, 7.0
    %v73 = vmul.f32 %v61, 7.0
    %v74 = vmul.f32 %v62, 7.0
    %v75 = vmul.f32 %v63, 7.0
    %v76 = vmul.f32 %v64, 7.0
    %v77 = vmul.f32 %v65, 7.0
    %v78 = vcvt.f32.s32.to.zero.pseudo %v66
    %v79 = vcvt.f32.s32.to.zero.pseudo %v67
    %v80 = vcvt.f32.s32.to.zero.pseudo %v68
    %v81 = vcvt.f32.s32.to.zero.pseudo %v69
    %v82 = vcvt.f32.s32.to.zero.pseudo %v70
    %v83 = vcvt.f32.s32.to.zero.pseudo %v71
    %v84 = vcvt.f32.s32.to.zero.pseudo %v72
    %v85 = vcvt.f32.s32.to.zero.pseudo %v73
    %v86 = vcvt.f32.s32.to.zero.pseudo %v74
    %v87 = vcvt.f32.s32.to.zero.pseudo %v75
    %v88 = vcvt.f32.s32.to.zero.pseudo %v76
    %v89 = vcvt.f32.s32.to.zero.pseudo %v77
    %vm90 = vcmp.gt.s32.totalorder %v78, 0
    %v91 = vsel %vm90, %v78, 0
    %vm92 = vcmp.gt.s32.totalorder %v79, 0
    %v93 = vsel %vm92, %v79, 0
    %vm94 = vcmp.gt.s32.totalorder %v80, 0
    %v95 = vsel %vm94, %v80, 0
    %vm96 = vcmp.gt.s32.totalorder %v81, 0
    %v97 = vsel %vm96, %v81, 0
    %vm98 = vcmp.gt.s32.totalorder %v82, 0
    %v99 = vsel %vm98, %v82, 0
    %vm100 = vcmp.gt.s32.totalorder %v83, 0
    %v101 = vsel %vm100, %v83, 0
    %vm102 = vcmp.gt.s32.totalorder %v84, 0
    %v103 = vsel %vm102, %v84, 0
    %vm104 = vcmp.gt.s32.totalorder %v85, 0
    %v105 = vsel %vm104, %v85, 0
    %vm106 = vcmp.gt.s32.totalorder %v86, 0
    %v107 = vsel %vm106, %v86, 0
    %vm108 = vcmp.gt.s32.totalorder %v87, 0
    %v109 = vsel %vm108, %v87, 0
    %vm110 = vcmp.gt.s32.totalorder %v88, 0
    %v111 = vsel %vm110, %v88, 0
    %vm112 = vcmp.gt.s32.totalorder %v89, 0
    %v113 = vsel %vm112, %v89, 0
    %vm114 = vcmp.lt.s32.totalorder %v91, 7
    %v115 = vsel %vm114, %v91, 7
    %vm116 = vcmp.lt.s32.totalorder %v93, 7
    %v117 = vsel %vm116, %v93, 7
    %vm118 = vcmp.lt.s32.totalorder %v95, 7
    %v119 = vsel %vm118, %v95, 7
    %vm120 = vcmp.lt.s32.totalorder %v97, 7
    %v121 = vsel %vm120, %v97, 7
    %vm122 = vcmp.lt.s32.totalorder %v99, 7
    %v123 = vsel %vm122, %v99, 7
    %vm124 = vcmp.lt.s32.totalorder %v101, 7
    %v125 = vsel %vm124, %v101, 7
    %vm126 = vcmp.lt.s32.totalorder %v103, 7
    %v127 = vsel %vm126, %v103, 7
    %vm128 = vcmp.lt.s32.totalorder %v105, 7
    %v129 = vsel %vm128, %v105, 7
    %vm130 = vcmp.lt.s32.totalorder %v107, 7
    %v131 = vsel %vm130, %v107, 7
    %vm132 = vcmp.lt.s32.totalorder %v109, 7
    %v133 = vsel %vm132, %v109, 7
    %vm134 = vcmp.lt.s32.totalorder %v111, 7
    %v135 = vsel %vm134, %v111, 7
    %vm136 = vcmp.lt.s32.totalorder %v113, 7
    %v137 = vsel %vm136, %v113, 7
    %v138 = vlaneseq
    %v139 = vshrl.u32 %v138, 7
    %v140 = vcombine.low %v115, %v117
    %v141 = vcombine.high %v115, %v117
    %v142 = vcombine.low %v119, %v121
    %v143 = vcombine.high %v119, %v121
    %v144 = vcombine.low %v123, %v125
    %v145 = vcombine.high %v123, %v125
    %v147 = vunpack.c.l.s4 1966171168
    %v148 = vunpack.c.0.s8 %v147
    %v149 = vlaneseq
    %v150 = vshrl.u32 %v149, 7
    %v151 = vsub.s32 %v148, %v150
    %v152 = vrot.slane %v140, %v151
    %v154 = vunpack.c.l.s4 1966171168
    %v155 = vunpack.c.0.s8 %v154
    %v156 = vlaneseq
    %v157 = vshrl.u32 %v156, 7
    %v158 = vsub.s32 %v155, %v157
    %v159 = vrot.slane %v141, %v158
    %v161 = vunpack.c.l.s4 1966171168
    %v162 = vunpack.c.0.s8 %v161
    %v163 = vlaneseq
    %v164 = vshrl.u32 %v163, 7
    %v165 = vsub.s32 %v162, %v164
    %v166 = vrot.slane %v142, %v165
    %v168 = vunpack.c.l.s4 1966171168
    %v169 = vunpack.c.0.s8 %v168
    %v170 = vlaneseq
    %v171 = vshrl.u32 %v170, 7
    %v172 = vsub.s32 %v169, %v171
    %v173 = vrot.slane %v143, %v172
    %v175 = vunpack.c.l.s4 1966171168
    %v176 = vunpack.c.0.s8 %v175
    %v177 = vlaneseq
    %v178 = vshrl.u32 %v177, 7
    %v179 = vsub.s32 %v176, %v178
    %v180 = vrot.slane %v144, %v179
    %v182 = vunpack.c.l.s4 1966171168
    %v183 = vunpack.c.0.s8 %v182
    %v184 = vlaneseq
    %v185 = vshrl.u32 %v184, 7
    %v186 = vsub.s32 %v183, %v185
    %v187 = vrot.slane %v145, %v186
    %v188 = vcombine.low %v152, %v166
    %v189 = vcombine.high %v152, %v166
    %v190 = vcombine.low %v159, %v173
    %v191 = vcombine.high %v159, %v173
    %v192 = vcombine.high %v180, %v180
    %v193 = vcombine.high %v187, %v187
    %v195 = vunpack.c.l.s4 1966171168
    %v196 = vunpack.c.0.s8 %v195
    %v197 = vlaneseq
    %v198 = vshrl.u32 %v197, 7
    %v199 = vsub.s32 %v196, %v198
    %v200 = vrot.slane %v188, %v199
    %v202 = vunpack.c.l.s4 1966171168
    %v203 = vunpack.c.0.s8 %v202
    %v204 = vlaneseq
    %v205 = vshrl.u32 %v204, 7
    %v206 = vsub.s32 %v203, %v205
    %v207 = vrot.slane %v190, %v206
    %v209 = vunpack.c.l.s4 1966171168
    %v210 = vunpack.c.0.s8 %v209
    %v211 = vlaneseq
    %v212 = vshrl.u32 %v211, 7
    %v213 = vsub.s32 %v210, %v212
    %v214 = vrot.slane %v189, %v213
    %v216 = vunpack.c.l.s4 1966171168
    %v217 = vunpack.c.0.s8 %v216
    %v218 = vlaneseq
    %v219 = vshrl.u32 %v218, 7
    %v220 = vsub.s32 %v217, %v219
    %v221 = vrot.slane %v191, %v220
    %v223 = vunpack.c.l.s4 1966171168
    %v224 = vunpack.c.0.s8 %v223
    %v225 = vlaneseq
    %v226 = vshrl.u32 %v225, 7
    %v227 = vsub.s32 %v224, %v226
    %v228 = vrot.slane %v180, %v227
    %v230 = vunpack.c.l.s4 1966171168
    %v231 = vunpack.c.0.s8 %v230
    %v232 = vlaneseq
    %v233 = vshrl.u32 %v232, 7
    %v234 = vsub.s32 %v231, %v233
    %v235 = vrot.slane %v187, %v234
    %v237 = vunpack.c.l.s4 1966171168
    %v238 = vunpack.c.0.s8 %v237
    %v239 = vlaneseq
    %v240 = vshrl.u32 %v239, 7
    %v241 = vsub.s32 %v238, %v240
    %v242 = vrot.slane %v192, %v241
    %v244 = vunpack.c.l.s4 1966171168
    %v245 = vunpack.c.0.s8 %v244
    %v246 = vlaneseq
    %v247 = vshrl.u32 %v246, 7
    %v248 = vsub.s32 %v245, %v247
    %v249 = vrot.slane %v193, %v248
    %v250 = vcombine.low %v200, %v228
    %v251 = vcombine.high %v200, %v228
    %v252 = vcombine.low %v207, %v235
    %v253 = vcombine.high %v207, %v235
    %v254 = vcombine.low %v214, %v242
    %v255 = vcombine.high %v214, %v242
    %v256 = vcombine.low %v221, %v249
    %v257 = vcombine.high %v221, %v249
    %v258 = vcombine.low %v127, %v129
    %v259 = vcombine.high %v127, %v129
    %v260 = vcombine.low %v131, %v133
    %v261 = vcombine.high %v131, %v133
    %v262 = vcombine.low %v135, %v137
    %v263 = vcombine.high %v135, %v137
    %v265 = vunpack.c.l.s4 1966171168
    %v266 = vunpack.c.0.s8 %v265
    %v267 = vlaneseq
    %v268 = vshrl.u32 %v267, 7
    %v269 = vsub.s32 %v266, %v268
    %v270 = vrot.slane %v258, %v269
    %v272 = vunpack.c.l.s4 1966171168
    %v273 = vunpack.c.0.s8 %v272
    %v274 = vlaneseq
    %v275 = vshrl.u32 %v274, 7
    %v276 = vsub.s32 %v273, %v275
    %v277 = vrot.slane %v259, %v276
    %v279 = vunpack.c.l.s4 1966171168
    %v280 = vunpack.c.0.s8 %v279
    %v281 = vlaneseq
    %v282 = vshrl.u32 %v281, 7
    %v283 = vsub.s32 %v280, %v282
    %v284 = vrot.slane %v260, %v283
    %v286 = vunpack.c.l.s4 1966171168
    %v287 = vunpack.c.0.s8 %v286
    %v288 = vlaneseq
    %v289 = vshrl.u32 %v288, 7
    %v290 = vsub.s32 %v287, %v289
    %v291 = vrot.slane %v261, %v290
    %v293 = vunpack.c.l.s4 1966171168
    %v294 = vunpack.c.0.s8 %v293
    %v295 = vlaneseq
    %v296 = vshrl.u32 %v295, 7
    %v297 = vsub.s32 %v294, %v296
    %v298 = vrot.slane %v262, %v297
    %v300 = vunpack.c.l.s4 1966171168
    %v301 = vunpack.c.0.s8 %v300
    %v302 = vlaneseq
    %v303 = vshrl.u32 %v302, 7
    %v304 = vsub.s32 %v301, %v303
    %v305 = vrot.slane %v263, %v304
    %v306 = vcombine.low %v270, %v284
    %v307 = vcombine.high %v270, %v284
    %v308 = vcombine.low %v277, %v291
    %v309 = vcombine.high %v277, %v291
    %v310 = vcombine.high %v298, %v298
    %v311 = vcombine.high %v305, %v305
    %v313 = vunpack.c.l.s4 1966171168
    %v314 = vunpack.c.0.s8 %v313
    %v315 = vlaneseq
    %v316 = vshrl.u32 %v315, 7
    %v317 = vsub.s32 %v314, %v316
    %v318 = vrot.slane %v306, %v317
    %v320 = vunpack.c.l.s4 1966171168
    %v321 = vunpack.c.0.s8 %v320
    %v322 = vlaneseq
    %v323 = vshrl.u32 %v322, 7
    %v324 = vsub.s32 %v321, %v323
    %v325 = vrot.slane %v308, %v324
    %v327 = vunpack.c.l.s4 1966171168
    %v328 = vunpack.c.0.s8 %v327
    %v329 = vlaneseq
    %v330 = vshrl.u32 %v329, 7
    %v331 = vsub.s32 %v328, %v330
    %v332 = vrot.slane %v307, %v331
    %v334 = vunpack.c.l.s4 1966171168
    %v335 = vunpack.c.0.s8 %v334
    %v336 = vlaneseq
    %v337 = vshrl.u32 %v336, 7
    %v338 = vsub.s32 %v335, %v337
    %v339 = vrot.slane %v309, %v338
    %v341 = vunpack.c.l.s4 1966171168
    %v342 = vunpack.c.0.s8 %v341
    %v343 = vlaneseq
    %v344 = vshrl.u32 %v343, 7
    %v345 = vsub.s32 %v342, %v344
    %v346 = vrot.slane %v298, %v345
    %v348 = vunpack.c.l.s4 1966171168
    %v349 = vunpack.c.0.s8 %v348
    %v350 = vlaneseq
    %v351 = vshrl.u32 %v350, 7
    %v352 = vsub.s32 %v349, %v351
    %v353 = vrot.slane %v305, %v352
    %v355 = vunpack.c.l.s4 1966171168
    %v356 = vunpack.c.0.s8 %v355
    %v357 = vlaneseq
    %v358 = vshrl.u32 %v357, 7
    %v359 = vsub.s32 %v356, %v358
    %v360 = vrot.slane %v310, %v359
    %v362 = vunpack.c.l.s4 1966171168
    %v363 = vunpack.c.0.s8 %v362
    %v364 = vlaneseq
    %v365 = vshrl.u32 %v364, 7
    %v366 = vsub.s32 %v363, %v365
    %v367 = vrot.slane %v311, %v366
    %v368 = vcombine.low %v318, %v346
    %v369 = vcombine.high %v318, %v346
    %v370 = vcombine.low %v325, %v353
    %v371 = vcombine.high %v325, %v353
    %v372 = vcombine.low %v332, %v360
    %v373 = vcombine.high %v332, %v360
    %v374 = vcombine.low %v339, %v367
    %v375 = vcombine.high %v339, %v367
    %v376 = vlaneseq
    %v377 = vshrl.u32 %v376, 7
    %v378 = vsub.s32 0, %v377
    %v379 = vrot.slane %v250, %v378
    %v380 = vlaneseq
    %v381 = vshrl.u32 %v380, 7
    %v382 = vsub.s32 1, %v381
    %v383 = vrot.slane %v250, %v382
    %v384 = vlaneseq
    %v385 = vshrl.u32 %v384, 7
    %v386 = vsub.s32 2, %v385
    %v387 = vrot.slane %v250, %v386
    %v388 = vlaneseq
    %v389 = vshrl.u32 %v388, 7
    %v390 = vsub.s32 3, %v389
    %v391 = vrot.slane %v250, %v390
    %v392 = vlaneseq
    %v393 = vshrl.u32 %v392, 7
    %v394 = vsub.s32 4, %v393
    %v395 = vrot.slane %v250, %v394
    %v396 = vlaneseq
    %v397 = vshrl.u32 %v396, 7
    %v398 = vsub.s32 5, %v397
    %v399 = vrot.slane %v250, %v398
    %v400 = vlaneseq
    %v401 = vshrl.u32 %v400, 7
    %v402 = vsub.s32 0, %v401
    %v403 = vrot.slane %v254, %v402
    %v404 = vlaneseq
    %v405 = vshrl.u32 %v404, 7
    %v406 = vsub.s32 1, %v405
    %v407 = vrot.slane %v254, %v406
    %v408 = vlaneseq
    %v409 = vshrl.u32 %v408, 7
    %v410 = vsub.s32 2, %v409
    %v411 = vrot.slane %v254, %v410
    %v412 = vlaneseq
    %v413 = vshrl.u32 %v412, 7
    %v414 = vsub.s32 3, %v413
    %v415 = vrot.slane %v254, %v414
    %v416 = vlaneseq
    %v417 = vshrl.u32 %v416, 7
    %v418 = vsub.s32 4, %v417
    %v419 = vrot.slane %v254, %v418
    %v420 = vlaneseq
    %v421 = vshrl.u32 %v420, 7
    %v422 = vsub.s32 5, %v421
    %v423 = vrot.slane %v254, %v422
    %v424 = vlaneseq
    %v425 = vshrl.u32 %v424, 7
    %v426 = vsub.s32 0, %v425
    %v427 = vrot.slane %v251, %v426
    %v428 = vlaneseq
    %v429 = vshrl.u32 %v428, 7
    %v430 = vsub.s32 1, %v429
    %v431 = vrot.slane %v251, %v430
    %v432 = vlaneseq
    %v433 = vshrl.u32 %v432, 7
    %v434 = vsub.s32 2, %v433
    %v435 = vrot.slane %v251, %v434
    %v436 = vlaneseq
    %v437 = vshrl.u32 %v436, 7
    %v438 = vsub.s32 3, %v437
    %v439 = vrot.slane %v251, %v438
    %v440 = vlaneseq
    %v441 = vshrl.u32 %v440, 7
    %v442 = vsub.s32 4, %v441
    %v443 = vrot.slane %v251, %v442
    %v444 = vlaneseq
    %v445 = vshrl.u32 %v444, 7
    %v446 = vsub.s32 5, %v445
    %v447 = vrot.slane %v251, %v446
    %v448 = vlaneseq
    %v449 = vshrl.u32 %v448, 7
    %v450 = vsub.s32 0, %v449
    %v451 = vrot.slane %v255, %v450
    %v452 = vlaneseq
    %v453 = vshrl.u32 %v452, 7
    %v454 = vsub.s32 1, %v453
    %v455 = vrot.slane %v255, %v454
    %v456 = vlaneseq
    %v457 = vshrl.u32 %v456, 7
    %v458 = vsub.s32 2, %v457
    %v459 = vrot.slane %v255, %v458
    %v460 = vlaneseq
    %v461 = vshrl.u32 %v460, 7
    %v462 = vsub.s32 3, %v461
    %v463 = vrot.slane %v255, %v462
    %v464 = vlaneseq
    %v465 = vshrl.u32 %v464, 7
    %v466 = vsub.s32 4, %v465
    %v467 = vrot.slane %v255, %v466
    %v468 = vlaneseq
    %v469 = vshrl.u32 %v468, 7
    %v470 = vsub.s32 5, %v469
    %v471 = vrot.slane %v255, %v470
    %v472 = vlaneseq
    %v473 = vshrl.u32 %v472, 7
    %v474 = vsub.s32 0, %v473
    %v475 = vrot.slane %v252, %v474
    %v476 = vlaneseq
    %v477 = vshrl.u32 %v476, 7
    %v478 = vsub.s32 1, %v477
    %v479 = vrot.slane %v252, %v478
    %v480 = vlaneseq
    %v481 = vshrl.u32 %v480, 7
    %v482 = vsub.s32 2, %v481
    %v483 = vrot.slane %v252, %v482
    %v484 = vlaneseq
    %v485 = vshrl.u32 %v484, 7
    %v486 = vsub.s32 3, %v485
    %v487 = vrot.slane %v252, %v486
    %v488 = vlaneseq
    %v489 = vshrl.u32 %v488, 7
    %v490 = vsub.s32 4, %v489
    %v491 = vrot.slane %v252, %v490
    %v492 = vlaneseq
    %v493 = vshrl.u32 %v492, 7
    %v494 = vsub.s32 5, %v493
    %v495 = vrot.slane %v252, %v494
    %v496 = vlaneseq
    %v497 = vshrl.u32 %v496, 7
    %v498 = vsub.s32 0, %v497
    %v499 = vrot.slane %v256, %v498
    %v500 = vlaneseq
    %v501 = vshrl.u32 %v500, 7
    %v502 = vsub.s32 1, %v501
    %v503 = vrot.slane %v256, %v502
    %v504 = vlaneseq
    %v505 = vshrl.u32 %v504, 7
    %v506 = vsub.s32 2, %v505
    %v507 = vrot.slane %v256, %v506
    %v508 = vlaneseq
    %v509 = vshrl.u32 %v508, 7
    %v510 = vsub.s32 3, %v509
    %v511 = vrot.slane %v256, %v510
    %v512 = vlaneseq
    %v513 = vshrl.u32 %v512, 7
    %v514 = vsub.s32 4, %v513
    %v515 = vrot.slane %v256, %v514
    %v516 = vlaneseq
    %v517 = vshrl.u32 %v516, 7
    %v518 = vsub.s32 5, %v517
    %v519 = vrot.slane %v256, %v518
    %v520 = vlaneseq
    %v521 = vshrl.u32 %v520, 7
    %v522 = vsub.s32 0, %v521
    %v523 = vrot.slane %v253, %v522
    %v524 = vlaneseq
    %v525 = vshrl.u32 %v524, 7
    %v526 = vsub.s32 1, %v525
    %v527 = vrot.slane %v253, %v526
    %v528 = vlaneseq
    %v529 = vshrl.u32 %v528, 7
    %v530 = vsub.s32 2, %v529
    %v531 = vrot.slane %v253, %v530
    %v532 = vlaneseq
    %v533 = vshrl.u32 %v532, 7
    %v534 = vsub.s32 3, %v533
    %v535 = vrot.slane %v253, %v534
    %v536 = vlaneseq
    %v537 = vshrl.u32 %v536, 7
    %v538 = vsub.s32 4, %v537
    %v539 = vrot.slane %v253, %v538
    %v540 = vlaneseq
    %v541 = vshrl.u32 %v540, 7
    %v542 = vsub.s32 5, %v541
    %v543 = vrot.slane %v253, %v542
    %v544 = vlaneseq
    %v545 = vshrl.u32 %v544, 7
    %v546 = vsub.s32 0, %v545
    %v547 = vrot.slane %v257, %v546
    %v548 = vlaneseq
    %v549 = vshrl.u32 %v548, 7
    %v550 = vsub.s32 1, %v549
    %v551 = vrot.slane %v257, %v550
    %v552 = vlaneseq
    %v553 = vshrl.u32 %v552, 7
    %v554 = vsub.s32 2, %v553
    %v555 = vrot.slane %v257, %v554
    %v556 = vlaneseq
    %v557 = vshrl.u32 %v556, 7
    %v558 = vsub.s32 3, %v557
    %v559 = vrot.slane %v257, %v558
    %v560 = vlaneseq
    %v561 = vshrl.u32 %v560, 7
    %v562 = vsub.s32 4, %v561
    %v563 = vrot.slane %v257, %v562
    %v564 = vlaneseq
    %v565 = vshrl.u32 %v564, 7
    %v566 = vsub.s32 5, %v565
    %v567 = vrot.slane %v257, %v566
    %v568 = vlaneseq
    %v569 = vshrl.u32 %v568, 7
    %v570 = vsub.s32 0, %v569
    %v571 = vrot.slane %v368, %v570
    %v572 = vlaneseq
    %v573 = vshrl.u32 %v572, 7
    %v574 = vsub.s32 1, %v573
    %v575 = vrot.slane %v368, %v574
    %v576 = vlaneseq
    %v577 = vshrl.u32 %v576, 7
    %v578 = vsub.s32 2, %v577
    %v579 = vrot.slane %v368, %v578
    %v580 = vlaneseq
    %v581 = vshrl.u32 %v580, 7
    %v582 = vsub.s32 3, %v581
    %v583 = vrot.slane %v368, %v582
    %v584 = vlaneseq
    %v585 = vshrl.u32 %v584, 7
    %v586 = vsub.s32 4, %v585
    %v587 = vrot.slane %v368, %v586
    %v588 = vlaneseq
    %v589 = vshrl.u32 %v588, 7
    %v590 = vsub.s32 5, %v589
    %v591 = vrot.slane %v368, %v590
    %v592 = vlaneseq
    %v593 = vshrl.u32 %v592, 7
    %v594 = vsub.s32 0, %v593
    %v595 = vrot.slane %v372, %v594
    %v596 = vlaneseq
    %v597 = vshrl.u32 %v596, 7
    %v598 = vsub.s32 1, %v597
    %v599 = vrot.slane %v372, %v598
    %v600 = vlaneseq
    %v601 = vshrl.u32 %v600, 7
    %v602 = vsub.s32 2, %v601
    %v603 = vrot.slane %v372, %v602
    %v604 = vlaneseq
    %v605 = vshrl.u32 %v604, 7
    %v606 = vsub.s32 3, %v605
    %v607 = vrot.slane %v372, %v606
    %v608 = vlaneseq
    %v609 = vshrl.u32 %v608, 7
    %v610 = vsub.s32 4, %v609
    %v611 = vrot.slane %v372, %v610
    %v612 = vlaneseq
    %v613 = vshrl.u32 %v612, 7
    %v614 = vsub.s32 5, %v613
    %v615 = vrot.slane %v372, %v614
    %v616 = vlaneseq
    %v617 = vshrl.u32 %v616, 7
    %v618 = vsub.s32 0, %v617
    %v619 = vrot.slane %v369, %v618
    %v620 = vlaneseq
    %v621 = vshrl.u32 %v620, 7
    %v622 = vsub.s32 1, %v621
    %v623 = vrot.slane %v369, %v622
    %v624 = vlaneseq
    %v625 = vshrl.u32 %v624, 7
    %v626 = vsub.s32 2, %v625
    %v627 = vrot.slane %v369, %v626
    %v628 = vlaneseq
    %v629 = vshrl.u32 %v628, 7
    %v630 = vsub.s32 3, %v629
    %v631 = vrot.slane %v369, %v630
    %v632 = vlaneseq
    %v633 = vshrl.u32 %v632, 7
    %v634 = vsub.s32 4, %v633
    %v635 = vrot.slane %v369, %v634
    %v636 = vlaneseq
    %v637 = vshrl.u32 %v636, 7
    %v638 = vsub.s32 5, %v637
    %v639 = vrot.slane %v369, %v638
    %v640 = vlaneseq
    %v641 = vshrl.u32 %v640, 7
    %v642 = vsub.s32 0, %v641
    %v643 = vrot.slane %v373, %v642
    %v644 = vlaneseq
    %v645 = vshrl.u32 %v644, 7
    %v646 = vsub.s32 1, %v645
    %v647 = vrot.slane %v373, %v646
    %v648 = vlaneseq
    %v649 = vshrl.u32 %v648, 7
    %v650 = vsub.s32 2, %v649
    %v651 = vrot.slane %v373, %v650
    %v652 = vlaneseq
    %v653 = vshrl.u32 %v652, 7
    %v654 = vsub.s32 3, %v653
    %v655 = vrot.slane %v373, %v654
    %v656 = vlaneseq
    %v657 = vshrl.u32 %v656, 7
    %v658 = vsub.s32 4, %v657
    %v659 = vrot.slane %v373, %v658
    %v660 = vlaneseq
    %v661 = vshrl.u32 %v660, 7
    %v662 = vsub.s32 5, %v661
    %v663 = vrot.slane %v373, %v662
    %v664 = vlaneseq
    %v665 = vshrl.u32 %v664, 7
    %v666 = vsub.s32 0, %v665
    %v667 = vrot.slane %v370, %v666
    %v668 = vlaneseq
    %v669 = vshrl.u32 %v668, 7
    %v670 = vsub.s32 1, %v669
    %v671 = vrot.slane %v370, %v670
    %v672 = vlaneseq
    %v673 = vshrl.u32 %v672, 7
    %v674 = vsub.s32 2, %v673
    %v675 = vrot.slane %v370, %v674
    %v676 = vlaneseq
    %v677 = vshrl.u32 %v676, 7
    %v678 = vsub.s32 3, %v677
    %v679 = vrot.slane %v370, %v678
    %v680 = vlaneseq
    %v681 = vshrl.u32 %v680, 7
    %v682 = vsub.s32 4, %v681
    %v683 = vrot.slane %v370, %v682
    %v684 = vlaneseq
    %v685 = vshrl.u32 %v684, 7
    %v686 = vsub.s32 5, %v685
    %v687 = vrot.slane %v370, %v686
    %v688 = vlaneseq
    %v689 = vshrl.u32 %v688, 7
    %v690 = vsub.s32 0, %v689
    %v691 = vrot.slane %v374, %v690
    %v692 = vlaneseq
    %v693 = vshrl.u32 %v692, 7
    %v694 = vsub.s32 1, %v693
    %v695 = vrot.slane %v374, %v694
    %v696 = vlaneseq
    %v697 = vshrl.u32 %v696, 7
    %v698 = vsub.s32 2, %v697
    %v699 = vrot.slane %v374, %v698
    %v700 = vlaneseq
    %v701 = vshrl.u32 %v700, 7
    %v702 = vsub.s32 3, %v701
    %v703 = vrot.slane %v374, %v702
    %v704 = vlaneseq
    %v705 = vshrl.u32 %v704, 7
    %v706 = vsub.s32 4, %v705
    %v707 = vrot.slane %v374, %v706
    %v708 = vlaneseq
    %v709 = vshrl.u32 %v708, 7
    %v710 = vsub.s32 5, %v709
    %v711 = vrot.slane %v374, %v710
    %v712 = vlaneseq
    %v713 = vshrl.u32 %v712, 7
    %v714 = vsub.s32 0, %v713
    %v715 = vrot.slane %v371, %v714
    %v716 = vlaneseq
    %v717 = vshrl.u32 %v716, 7
    %v718 = vsub.s32 1, %v717
    %v719 = vrot.slane %v371, %v718
    %v720 = vlaneseq
    %v721 = vshrl.u32 %v720, 7
    %v722 = vsub.s32 2, %v721
    %v723 = vrot.slane %v371, %v722
    %v724 = vlaneseq
    %v725 = vshrl.u32 %v724, 7
    %v726 = vsub.s32 3, %v725
    %v727 = vrot.slane %v371, %v726
    %v728 = vlaneseq
    %v729 = vshrl.u32 %v728, 7
    %v730 = vsub.s32 4, %v729
    %v731 = vrot.slane %v371, %v730
    %v732 = vlaneseq
    %v733 = vshrl.u32 %v732, 7
    %v734 = vsub.s32 5, %v733
    %v735 = vrot.slane %v371, %v734
    %v736 = vlaneseq
    %v737 = vshrl.u32 %v736, 7
    %v738 = vsub.s32 0, %v737
    %v739 = vrot.slane %v375, %v738
    %v740 = vlaneseq
    %v741 = vshrl.u32 %v740, 7
    %v742 = vsub.s32 1, %v741
    %v743 = vrot.slane %v375, %v742
    %v744 = vlaneseq
    %v745 = vshrl.u32 %v744, 7
    %v746 = vsub.s32 2, %v745
    %v747 = vrot.slane %v375, %v746
    %v748 = vlaneseq
    %v749 = vshrl.u32 %v748, 7
    %v750 = vsub.s32 3, %v749
    %v751 = vrot.slane %v375, %v750
    %v752 = vlaneseq
    %v753 = vshrl.u32 %v752, 7
    %v754 = vsub.s32 4, %v753
    %v755 = vrot.slane %v375, %v754
    %v756 = vlaneseq
    %v757 = vshrl.u32 %v756, 7
    %v758 = vsub.s32 5, %v757
    %v759 = vrot.slane %v375, %v758
    %vm760 = vcmp.eq.s32.totalorder %v379, %v139
    %vm761 = vcmp.eq.s32.totalorder %v383, %v139
    %vm762 = vcmp.eq.s32.totalorder %v387, %v139
    %vm763 = vcmp.eq.s32.totalorder %v391, %v139
    %vm764 = vcmp.eq.s32.totalorder %v395, %v139
    %vm765 = vcmp.eq.s32.totalorder %v399, %v139
    %vm766 = vcmp.eq.s32.totalorder %v403, %v139
    %vm767 = vcmp.eq.s32.totalorder %v407, %v139
    %vm768 = vcmp.eq.s32.totalorder %v411, %v139
    %vm769 = vcmp.eq.s32.totalorder %v415, %v139
    %vm770 = vcmp.eq.s32.totalorder %v419, %v139
    %vm771 = vcmp.eq.s32.totalorder %v423, %v139
    %vm772 = vcmp.eq.s32.totalorder %v427, %v139
    %vm773 = vcmp.eq.s32.totalorder %v431, %v139
    %vm774 = vcmp.eq.s32.totalorder %v435, %v139
    %vm775 = vcmp.eq.s32.totalorder %v439, %v139
    %vm776 = vcmp.eq.s32.totalorder %v443, %v139
    %vm777 = vcmp.eq.s32.totalorder %v447, %v139
    %vm778 = vcmp.eq.s32.totalorder %v451, %v139
    %vm779 = vcmp.eq.s32.totalorder %v455, %v139
    %vm780 = vcmp.eq.s32.totalorder %v459, %v139
    %vm781 = vcmp.eq.s32.totalorder %v463, %v139
    %vm782 = vcmp.eq.s32.totalorder %v467, %v139
    %vm783 = vcmp.eq.s32.totalorder %v471, %v139
    %vm784 = vcmp.eq.s32.totalorder %v475, %v139
    %vm785 = vcmp.eq.s32.totalorder %v479, %v139
    %vm786 = vcmp.eq.s32.totalorder %v483, %v139
    %vm787 = vcmp.eq.s32.totalorder %v487, %v139
    %vm788 = vcmp.eq.s32.totalorder %v491, %v139
    %vm789 = vcmp.eq.s32.totalorder %v495, %v139
    %vm790 = vcmp.eq.s32.totalorder %v499, %v139
    %vm791 = vcmp.eq.s32.totalorder %v503, %v139
    %vm792 = vcmp.eq.s32.totalorder %v507, %v139
    %vm793 = vcmp.eq.s32.totalorder %v511, %v139
    %vm794 = vcmp.eq.s32.totalorder %v515, %v139
    %vm795 = vcmp.eq.s32.totalorder %v519, %v139
    %vm796 = vcmp.eq.s32.totalorder %v523, %v139
    %vm797 = vcmp.eq.s32.totalorder %v527, %v139
    %vm798 = vcmp.eq.s32.totalorder %v531, %v139
    %vm799 = vcmp.eq.s32.totalorder %v535, %v139
    %vm800 = vcmp.eq.s32.totalorder %v539, %v139
    %vm801 = vcmp.eq.s32.totalorder %v543, %v139
    %vm802 = vcmp.eq.s32.totalorder %v547, %v139
    %vm803 = vcmp.eq.s32.totalorder %v551, %v139
    %vm804 = vcmp.eq.s32.totalorder %v555, %v139
    %vm805 = vcmp.eq.s32.totalorder %v559, %v139
    %vm806 = vcmp.eq.s32.totalorder %v563, %v139
    %vm807 = vcmp.eq.s32.totalorder %v567, %v139
    %vm808 = vcmp.eq.s32.totalorder %v571, %v139
    %vm809 = vcmp.eq.s32.totalorder %v575, %v139
    %vm810 = vcmp.eq.s32.totalorder %v579, %v139
    %vm811 = vcmp.eq.s32.totalorder %v583, %v139
    %vm812 = vcmp.eq.s32.totalorder %v587, %v139
    %vm813 = vcmp.eq.s32.totalorder %v591, %v139
    %vm814 = vcmp.eq.s32.totalorder %v595, %v139
    %vm815 = vcmp.eq.s32.totalorder %v599, %v139
    %vm816 = vcmp.eq.s32.totalorder %v603, %v139
    %vm817 = vcmp.eq.s32.totalorder %v607, %v139
    %vm818 = vcmp.eq.s32.totalorder %v611, %v139
    %vm819 = vcmp.eq.s32.totalorder %v615, %v139
    %vm820 = vcmp.eq.s32.totalorder %v619, %v139
    %vm821 = vcmp.eq.s32.totalorder %v623, %v139
    %vm822 = vcmp.eq.s32.totalorder %v627, %v139
    %vm823 = vcmp.eq.s32.totalorder %v631, %v139
    %vm824 = vcmp.eq.s32.totalorder %v635, %v139
    %vm825 = vcmp.eq.s32.totalorder %v639, %v139
    %vm826 = vcmp.eq.s32.totalorder %v643, %v139
    %vm827 = vcmp.eq.s32.totalorder %v647, %v139
    %vm828 = vcmp.eq.s32.totalorder %v651, %v139
    %vm829 = vcmp.eq.s32.totalorder %v655, %v139
    %vm830 = vcmp.eq.s32.totalorder %v659, %v139
    %vm831 = vcmp.eq.s32.totalorder %v663, %v139
    %vm832 = vcmp.eq.s32.totalorder %v667, %v139
    %vm833 = vcmp.eq.s32.totalorder %v671, %v139
    %vm834 = vcmp.eq.s32.totalorder %v675, %v139
    %vm835 = vcmp.eq.s32.totalorder %v679, %v139
    %vm836 = vcmp.eq.s32.totalorder %v683, %v139
    %vm837 = vcmp.eq.s32.totalorder %v687, %v139
    %vm838 = vcmp.eq.s32.totalorder %v691, %v139
    %vm839 = vcmp.eq.s32.totalorder %v695, %v139
    %vm840 = vcmp.eq.s32.totalorder %v699, %v139
    %vm841 = vcmp.eq.s32.totalorder %v703, %v139
    %vm842 = vcmp.eq.s32.totalorder %v707, %v139
    %vm843 = vcmp.eq.s32.totalorder %v711, %v139
    %vm844 = vcmp.eq.s32.totalorder %v715, %v139
    %vm845 = vcmp.eq.s32.totalorder %v719, %v139
    %vm846 = vcmp.eq.s32.totalorder %v723, %v139
    %vm847 = vcmp.eq.s32.totalorder %v727, %v139
    %vm848 = vcmp.eq.s32.totalorder %v731, %v139
    %vm849 = vcmp.eq.s32.totalorder %v735, %v139
    %vm850 = vcmp.eq.s32.totalorder %v739, %v139
    %vm851 = vcmp.eq.s32.totalorder %v743, %v139
    %vm852 = vcmp.eq.s32.totalorder %v747, %v139
    %vm853 = vcmp.eq.s32.totalorder %v751, %v139
    %vm854 = vcmp.eq.s32.totalorder %v755, %v139
    %vm855 = vcmp.eq.s32.totalorder %v759, %v139
    %v856 = vsel %vm760, 1, 0
    %v857 = vsel %vm761, 1, 0
    %v858 = vsel %vm762, 1, 0
    %v859 = vsel %vm763, 1, 0
    %v860 = vsel %vm764, 1, 0
    %v861 = vsel %vm765, 1, 0
    %v862 = vsel %vm766, 1, 0
    %v863 = vsel %vm767, 1, 0
    %v864 = vsel %vm768, 1, 0
    %v865 = vsel %vm769, 1, 0
    %v866 = vsel %vm770, 1, 0
    %v867 = vsel %vm771, 1, 0
    %v868 = vsel %vm772, 1, 0
    %v869 = vsel %vm773, 1, 0
    %v870 = vsel %vm774, 1, 0
    %v871 = vsel %vm775, 1, 0
    %v872 = vsel %vm776, 1, 0
    %v873 = vsel %vm777, 1, 0
    %v874 = vsel %vm778, 1, 0
    %v875 = vsel %vm779, 1, 0
    %v876 = vsel %vm780, 1, 0
    %v877 = vsel %vm781, 1, 0
    %v878 = vsel %vm782, 1, 0
    %v879 = vsel %vm783, 1, 0
    %v880 = vsel %vm784, 1, 0
    %v881 = vsel %vm785, 1, 0
    %v882 = vsel %vm786, 1, 0
    %v883 = vsel %vm787, 1, 0
    %v884 = vsel %vm788, 1, 0
    %v885 = vsel %vm789, 1, 0
    %v886 = vsel %vm790, 1, 0
    %v887 = vsel %vm791, 1, 0
    %v888 = vsel %vm792, 1, 0
    %v889 = vsel %vm793, 1, 0
    %v890 = vsel %vm794, 1, 0
    %v891 = vsel %vm795, 1, 0
    %v892 = vsel %vm796, 1, 0
    %v893 = vsel %vm797, 1, 0
    %v894 = vsel %vm798, 1, 0
    %v895 = vsel %vm799, 1, 0
    %v896 = vsel %vm800, 1, 0
    %v897 = vsel %vm801, 1, 0
    %v898 = vsel %vm802, 1, 0
    %v899 = vsel %vm803, 1, 0
    %v900 = vsel %vm804, 1, 0
    %v901 = vsel %vm805, 1, 0
    %v902 = vsel %vm806, 1, 0
    %v903 = vsel %vm807, 1, 0
    %v904 = vsel %vm808, 1, 0
    %v905 = vsel %vm809, 1, 0
    %v906 = vsel %vm810, 1, 0
    %v907 = vsel %vm811, 1, 0
    %v908 = vsel %vm812, 1, 0
    %v909 = vsel %vm813, 1, 0
    %v910 = vsel %vm814, 1, 0
    %v911 = vsel %vm815, 1, 0
    %v912 = vsel %vm816, 1, 0
    %v913 = vsel %vm817, 1, 0
    %v914 = vsel %vm818, 1, 0
    %v915 = vsel %vm819, 1, 0
    %v916 = vsel %vm820, 1, 0
    %v917 = vsel %vm821, 1, 0
    %v918 = vsel %vm822, 1, 0
    %v919 = vsel %vm823, 1, 0
    %v920 = vsel %vm824, 1, 0
    %v921 = vsel %vm825, 1, 0
    %v922 = vsel %vm826, 1, 0
    %v923 = vsel %vm827, 1, 0
    %v924 = vsel %vm828, 1, 0
    %v925 = vsel %vm829, 1, 0
    %v926 = vsel %vm830, 1, 0
    %v927 = vsel %vm831, 1, 0
    %v928 = vsel %vm832, 1, 0
    %v929 = vsel %vm833, 1, 0
    %v930 = vsel %vm834, 1, 0
    %v931 = vsel %vm835, 1, 0
    %v932 = vsel %vm836, 1, 0
    %v933 = vsel %vm837, 1, 0
    %v934 = vsel %vm838, 1, 0
    %v935 = vsel %vm839, 1, 0
    %v936 = vsel %vm840, 1, 0
    %v937 = vsel %vm841, 1, 0
    %v938 = vsel %vm842, 1, 0
    %v939 = vsel %vm843, 1, 0
    %v940 = vsel %vm844, 1, 0
    %v941 = vsel %vm845, 1, 0
    %v942 = vsel %vm846, 1, 0
    %v943 = vsel %vm847, 1, 0
    %v944 = vsel %vm848, 1, 0
    %v945 = vsel %vm849, 1, 0
    %v946 = vsel %vm850, 1, 0
    %v947 = vsel %vm851, 1, 0
    %v948 = vsel %vm852, 1, 0
    %v949 = vsel %vm853, 1, 0
    %v950 = vsel %vm854, 1, 0
    %v951 = vsel %vm855, 1, 0
    %v952 = vcvt.s32.f32 %v856
    %v953 = vcvt.s32.f32 %v857
    %v954 = vcvt.s32.f32 %v858
    %v955 = vcvt.s32.f32 %v859
    %v956 = vcvt.s32.f32 %v860
    %v957 = vcvt.s32.f32 %v861
    %v958 = vcvt.s32.f32 %v862
    %v959 = vcvt.s32.f32 %v863
    %v960 = vcvt.s32.f32 %v864
    %v961 = vcvt.s32.f32 %v865
    %v962 = vcvt.s32.f32 %v866
    %v963 = vcvt.s32.f32 %v867
    %v964 = vcvt.s32.f32 %v868
    %v965 = vcvt.s32.f32 %v869
    %v966 = vcvt.s32.f32 %v870
    %v967 = vcvt.s32.f32 %v871
    %v968 = vcvt.s32.f32 %v872
    %v969 = vcvt.s32.f32 %v873
    %v970 = vcvt.s32.f32 %v874
    %v971 = vcvt.s32.f32 %v875
    %v972 = vcvt.s32.f32 %v876
    %v973 = vcvt.s32.f32 %v877
    %v974 = vcvt.s32.f32 %v878
    %v975 = vcvt.s32.f32 %v879
    %v976 = vcvt.s32.f32 %v880
    %v977 = vcvt.s32.f32 %v881
    %v978 = vcvt.s32.f32 %v882
    %v979 = vcvt.s32.f32 %v883
    %v980 = vcvt.s32.f32 %v884
    %v981 = vcvt.s32.f32 %v885
    %v982 = vcvt.s32.f32 %v886
    %v983 = vcvt.s32.f32 %v887
    %v984 = vcvt.s32.f32 %v888
    %v985 = vcvt.s32.f32 %v889
    %v986 = vcvt.s32.f32 %v890
    %v987 = vcvt.s32.f32 %v891
    %v988 = vcvt.s32.f32 %v892
    %v989 = vcvt.s32.f32 %v893
    %v990 = vcvt.s32.f32 %v894
    %v991 = vcvt.s32.f32 %v895
    %v992 = vcvt.s32.f32 %v896
    %v993 = vcvt.s32.f32 %v897
    %v994 = vcvt.s32.f32 %v898
    %v995 = vcvt.s32.f32 %v899
    %v996 = vcvt.s32.f32 %v900
    %v997 = vcvt.s32.f32 %v901
    %v998 = vcvt.s32.f32 %v902
    %v999 = vcvt.s32.f32 %v903
    %v1000 = vcvt.s32.f32 %v904
    %v1001 = vcvt.s32.f32 %v905
    %v1002 = vcvt.s32.f32 %v906
    %v1003 = vcvt.s32.f32 %v907
    %v1004 = vcvt.s32.f32 %v908
    %v1005 = vcvt.s32.f32 %v909
    %v1006 = vcvt.s32.f32 %v910
    %v1007 = vcvt.s32.f32 %v911
    %v1008 = vcvt.s32.f32 %v912
    %v1009 = vcvt.s32.f32 %v913
    %v1010 = vcvt.s32.f32 %v914
    %v1011 = vcvt.s32.f32 %v915
    %v1012 = vcvt.s32.f32 %v916
    %v1013 = vcvt.s32.f32 %v917
    %v1014 = vcvt.s32.f32 %v918
    %v1015 = vcvt.s32.f32 %v919
    %v1016 = vcvt.s32.f32 %v920
    %v1017 = vcvt.s32.f32 %v921
    %v1018 = vcvt.s32.f32 %v922
    %v1019 = vcvt.s32.f32 %v923
    %v1020 = vcvt.s32.f32 %v924
    %v1021 = vcvt.s32.f32 %v925
    %v1022 = vcvt.s32.f32 %v926
    %v1023 = vcvt.s32.f32 %v927
    %v1024 = vcvt.s32.f32 %v928
    %v1025 = vcvt.s32.f32 %v929
    %v1026 = vcvt.s32.f32 %v930
    %v1027 = vcvt.s32.f32 %v931
    %v1028 = vcvt.s32.f32 %v932
    %v1029 = vcvt.s32.f32 %v933
    %v1030 = vcvt.s32.f32 %v934
    %v1031 = vcvt.s32.f32 %v935
    %v1032 = vcvt.s32.f32 %v936
    %v1033 = vcvt.s32.f32 %v937
    %v1034 = vcvt.s32.f32 %v938
    %v1035 = vcvt.s32.f32 %v939
    %v1036 = vcvt.s32.f32 %v940
    %v1037 = vcvt.s32.f32 %v941
    %v1038 = vcvt.s32.f32 %v942
    %v1039 = vcvt.s32.f32 %v943
    %v1040 = vcvt.s32.f32 %v944
    %v1041 = vcvt.s32.f32 %v945
    %v1042 = vcvt.s32.f32 %v946
    %v1043 = vcvt.s32.f32 %v947
    %v1044 = vcvt.s32.f32 %v948
    %v1045 = vcvt.s32.f32 %v949
    %v1046 = vcvt.s32.f32 %v950
    %v1047 = vcvt.s32.f32 %v951
    %v1048 = vpack.c.bf16 %v952, %v952
    %v1049 = vpack.c.bf16 %v953, %v953
    %v1050 = vpack.c.bf16 %v954, %v954
    %v1051 = vpack.c.bf16 %v955, %v955
    %v1052 = vpack.c.bf16 %v956, %v956
    %v1053 = vpack.c.bf16 %v957, %v957
    %v1054 = vpack.c.bf16 %v958, %v958
    %v1055 = vpack.c.bf16 %v959, %v959
    %v1056 = vpack.c.bf16 %v960, %v960
    %v1057 = vpack.c.bf16 %v961, %v961
    %v1058 = vpack.c.bf16 %v962, %v962
    %v1059 = vpack.c.bf16 %v963, %v963
    %v1060 = vpack.c.bf16 %v964, %v964
    %v1061 = vpack.c.bf16 %v965, %v965
    %v1062 = vpack.c.bf16 %v966, %v966
    %v1063 = vpack.c.bf16 %v967, %v967
    %v1064 = vpack.c.bf16 %v968, %v968
    %v1065 = vpack.c.bf16 %v969, %v969
    %v1066 = vpack.c.bf16 %v970, %v970
    %v1067 = vpack.c.bf16 %v971, %v971
    %v1068 = vpack.c.bf16 %v972, %v972
    %v1069 = vpack.c.bf16 %v973, %v973
    %v1070 = vpack.c.bf16 %v974, %v974
    %v1071 = vpack.c.bf16 %v975, %v975
    %v1072 = vpack.c.bf16 %v976, %v976
    %v1073 = vpack.c.bf16 %v977, %v977
    %v1074 = vpack.c.bf16 %v978, %v978
    %v1075 = vpack.c.bf16 %v979, %v979
    %v1076 = vpack.c.bf16 %v980, %v980
    %v1077 = vpack.c.bf16 %v981, %v981
    %v1078 = vpack.c.bf16 %v982, %v982
    %v1079 = vpack.c.bf16 %v983, %v983
    %v1080 = vpack.c.bf16 %v984, %v984
    %v1081 = vpack.c.bf16 %v985, %v985
    %v1082 = vpack.c.bf16 %v986, %v986
    %v1083 = vpack.c.bf16 %v987, %v987
    %v1084 = vpack.c.bf16 %v988, %v988
    %v1085 = vpack.c.bf16 %v989, %v989
    %v1086 = vpack.c.bf16 %v990, %v990
    %v1087 = vpack.c.bf16 %v991, %v991
    %v1088 = vpack.c.bf16 %v992, %v992
    %v1089 = vpack.c.bf16 %v993, %v993
    %v1090 = vpack.c.bf16 %v994, %v994
    %v1091 = vpack.c.bf16 %v995, %v995
    %v1092 = vpack.c.bf16 %v996, %v996
    %v1093 = vpack.c.bf16 %v997, %v997
    %v1094 = vpack.c.bf16 %v998, %v998
    %v1095 = vpack.c.bf16 %v999, %v999
    %v1096 = vpack.c.bf16 %v1000, %v1000
    %v1097 = vpack.c.bf16 %v1001, %v1001
    %v1098 = vpack.c.bf16 %v1002, %v1002
    %v1099 = vpack.c.bf16 %v1003, %v1003
    %v1100 = vpack.c.bf16 %v1004, %v1004
    %v1101 = vpack.c.bf16 %v1005, %v1005
    %v1102 = vpack.c.bf16 %v1006, %v1006
    %v1103 = vpack.c.bf16 %v1007, %v1007
    %v1104 = vpack.c.bf16 %v1008, %v1008
    %v1105 = vpack.c.bf16 %v1009, %v1009
    %v1106 = vpack.c.bf16 %v1010, %v1010
    %v1107 = vpack.c.bf16 %v1011, %v1011
    %v1108 = vpack.c.bf16 %v1012, %v1012
    %v1109 = vpack.c.bf16 %v1013, %v1013
    %v1110 = vpack.c.bf16 %v1014, %v1014
    %v1111 = vpack.c.bf16 %v1015, %v1015
    %v1112 = vpack.c.bf16 %v1016, %v1016
    %v1113 = vpack.c.bf16 %v1017, %v1017
    %v1114 = vpack.c.bf16 %v1018, %v1018
    %v1115 = vpack.c.bf16 %v1019, %v1019
    %v1116 = vpack.c.bf16 %v1020, %v1020
    %v1117 = vpack.c.bf16 %v1021, %v1021
    %v1118 = vpack.c.bf16 %v1022, %v1022
    %v1119 = vpack.c.bf16 %v1023, %v1023
    %v1120 = vpack.c.bf16 %v1024, %v1024
    %v1121 = vpack.c.bf16 %v1025, %v1025
    %v1122 = vpack.c.bf16 %v1026, %v1026
    %v1123 = vpack.c.bf16 %v1027, %v1027
    %v1124 = vpack.c.bf16 %v1028, %v1028
    %v1125 = vpack.c.bf16 %v1029, %v1029
    %v1126 = vpack.c.bf16 %v1030, %v1030
    %v1127 = vpack.c.bf16 %v1031, %v1031
    %v1128 = vpack.c.bf16 %v1032, %v1032
    %v1129 = vpack.c.bf16 %v1033, %v1033
    %v1130 = vpack.c.bf16 %v1034, %v1034
    %v1131 = vpack.c.bf16 %v1035, %v1035
    %v1132 = vpack.c.bf16 %v1036, %v1036
    %v1133 = vpack.c.bf16 %v1037, %v1037
    %v1134 = vpack.c.bf16 %v1038, %v1038
    %v1135 = vpack.c.bf16 %v1039, %v1039
    %v1136 = vpack.c.bf16 %v1040, %v1040
    %v1137 = vpack.c.bf16 %v1041, %v1041
    %v1138 = vpack.c.bf16 %v1042, %v1042
    %v1139 = vpack.c.bf16 %v1043, %v1043
    %v1140 = vpack.c.bf16 %v1044, %v1044
    %v1141 = vpack.c.bf16 %v1045, %v1045
    %v1142 = vpack.c.bf16 %v1046, %v1046
    %v1143 = vpack.c.bf16 %v1047, %v1047
    %v1240 = vunpack.c.l.b16 %v1048
    %v1241 = vunpack.c.l.b16 %v1049
    %v1242 = vunpack.c.l.b16 %v1050
    %v1243 = vunpack.c.l.b16 %v1051
    %v1244 = vunpack.c.l.b16 %v1052
    %v1245 = vunpack.c.l.b16 %v1053
    %v1246 = vunpack.c.l.b16 %v1054
    %v1247 = vunpack.c.l.b16 %v1055
    %v1248 = vunpack.c.l.b16 %v1056
    %v1249 = vunpack.c.l.b16 %v1057
    %v1250 = vunpack.c.l.b16 %v1058
    %v1251 = vunpack.c.l.b16 %v1059
    %v1252 = vunpack.c.l.b16 %v1060
    %v1253 = vunpack.c.l.b16 %v1061
    %v1254 = vunpack.c.l.b16 %v1062
    %v1255 = vunpack.c.l.b16 %v1063
    %v1256 = vunpack.c.l.b16 %v1064
    %v1257 = vunpack.c.l.b16 %v1065
    %v1258 = vunpack.c.l.b16 %v1066
    %v1259 = vunpack.c.l.b16 %v1067
    %v1260 = vunpack.c.l.b16 %v1068
    %v1261 = vunpack.c.l.b16 %v1069
    %v1262 = vunpack.c.l.b16 %v1070
    %v1263 = vunpack.c.l.b16 %v1071
    %v1264 = vunpack.c.l.b16 %v1072
    %v1265 = vunpack.c.l.b16 %v1073
    %v1266 = vunpack.c.l.b16 %v1074
    %v1267 = vunpack.c.l.b16 %v1075
    %v1268 = vunpack.c.l.b16 %v1076
    %v1269 = vunpack.c.l.b16 %v1077
    %v1270 = vunpack.c.l.b16 %v1078
    %v1271 = vunpack.c.l.b16 %v1079
    %v1272 = vunpack.c.l.b16 %v1080
    %v1273 = vunpack.c.l.b16 %v1081
    %v1274 = vunpack.c.l.b16 %v1082
    %v1275 = vunpack.c.l.b16 %v1083
    %v1276 = vunpack.c.l.b16 %v1084
    %v1277 = vunpack.c.l.b16 %v1085
    %v1278 = vunpack.c.l.b16 %v1086
    %v1279 = vunpack.c.l.b16 %v1087
    %v1280 = vunpack.c.l.b16 %v1088
    %v1281 = vunpack.c.l.b16 %v1089
    %v1282 = vunpack.c.l.b16 %v1090
    %v1283 = vunpack.c.l.b16 %v1091
    %v1284 = vunpack.c.l.b16 %v1092
    %v1285 = vunpack.c.l.b16 %v1093
    %v1286 = vunpack.c.l.b16 %v1094
    %v1287 = vunpack.c.l.b16 %v1095
    %v1288 = vunpack.c.l.b16 %v1096
    %v1289 = vunpack.c.l.b16 %v1097
    %v1290 = vunpack.c.l.b16 %v1098
    %v1291 = vunpack.c.l.b16 %v1099
    %v1292 = vunpack.c.l.b16 %v1100
    %v1293 = vunpack.c.l.b16 %v1101
    %v1294 = vunpack.c.l.b16 %v1102
    %v1295 = vunpack.c.l.b16 %v1103
    %v1296 = vunpack.c.l.b16 %v1104
    %v1297 = vunpack.c.l.b16 %v1105
    %v1298 = vunpack.c.l.b16 %v1106
    %v1299 = vunpack.c.l.b16 %v1107
    %v1300 = vunpack.c.l.b16 %v1108
    %v1301 = vunpack.c.l.b16 %v1109
    %v1302 = vunpack.c.l.b16 %v1110
    %v1303 = vunpack.c.l.b16 %v1111
    %v1304 = vunpack.c.l.b16 %v1112
    %v1305 = vunpack.c.l.b16 %v1113
    %v1306 = vunpack.c.l.b16 %v1114
    %v1307 = vunpack.c.l.b16 %v1115
    %v1308 = vunpack.c.l.b16 %v1116
    %v1309 = vunpack.c.l.b16 %v1117
    %v1310 = vunpack.c.l.b16 %v1118
    %v1311 = vunpack.c.l.b16 %v1119
    %v1312 = vunpack.c.l.b16 %v1120
    %v1313 = vunpack.c.l.b16 %v1121
    %v1314 = vunpack.c.l.b16 %v1122
    %v1315 = vunpack.c.l.b16 %v1123
    %v1316 = vunpack.c.l.b16 %v1124
    %v1317 = vunpack.c.l.b16 %v1125
    %v1318 = vunpack.c.l.b16 %v1126
    %v1319 = vunpack.c.l.b16 %v1127
    %v1320 = vunpack.c.l.b16 %v1128
    %v1321 = vunpack.c.l.b16 %v1129
    %v1322 = vunpack.c.l.b16 %v1130
    %v1323 = vunpack.c.l.b16 %v1131
    %v1324 = vunpack.c.l.b16 %v1132
    %v1325 = vunpack.c.l.b16 %v1133
    %v1326 = vunpack.c.l.b16 %v1134
    %v1327 = vunpack.c.l.b16 %v1135
    %v1328 = vunpack.c.l.b16 %v1136
    %v1329 = vunpack.c.l.b16 %v1137
    %v1330 = vunpack.c.l.b16 %v1138
    %v1331 = vunpack.c.l.b16 %v1139
    %v1332 = vunpack.c.l.b16 %v1140
    %v1333 = vunpack.c.l.b16 %v1141
    %v1334 = vunpack.c.l.b16 %v1142
    %v1335 = vunpack.c.l.b16 %v1143
    %v1336 = vld [vmem:[#allocation5] sm:$0xff]
    %v1337 = vld [vmem:[#allocation5 + $0x8] sm:$0xff]
    %v1338 = vld [vmem:[#allocation5 + $0x10] sm:$0xff]
    %v1339 = vld [vmem:[#allocation5 + $0x18] sm:$0xff]
    %v1340 = vld [vmem:[#allocation5 + $0x20] sm:$0xff]
    %v1341 = vld [vmem:[#allocation5 + $0x28] sm:$0xff]
    %v1342 = vld [vmem:[#allocation5 + $0x30] sm:$0xff]
    %v1343 = vld [vmem:[#allocation5 + $0x38] sm:$0xff]
    %v1344 = vld [vmem:[#allocation5 + $0x40] sm:$0xff]
    %v1345 = vld [vmem:[#allocation5 + $0x48] sm:$0xff]
    %v1346 = vld [vmem:[#allocation5 + $0x50] sm:$0xff]
    %v1347 = vld [vmem:[#allocation5 + $0x58] sm:$0xff]
    %v1348 = vld [vmem:[#allocation5 + $0x60] sm:$0xff]
    %v1349 = vld [vmem:[#allocation5 + $0x68] sm:$0xff]
    %v1350 = vld [vmem:[#allocation5 + $0x70] sm:$0xff]
    %v1351 = vld [vmem:[#allocation5 + $0x78] sm:$0xff]
    %v1352 = vld [vmem:[#allocation5 + $0x80] sm:$0xff]
    %v1353 = vld [vmem:[#allocation5 + $0x88] sm:$0xff]
    %v1354 = vld [vmem:[#allocation5 + $0x90] sm:$0xff]
    %v1355 = vld [vmem:[#allocation5 + $0x98] sm:$0xff]
    %v1356 = vld [vmem:[#allocation5 + $0xa0] sm:$0xff]
    %v1357 = vld [vmem:[#allocation5 + $0xa8] sm:$0xff]
    %v1358 = vld [vmem:[#allocation5 + $0xb0] sm:$0xff]
    %v1359 = vld [vmem:[#allocation5 + $0xb8] sm:$0xff]
    %v1360 = vld [vmem:[#allocation5 + $0xc0] sm:$0xff]
    %v1361 = vld [vmem:[#allocation5 + $0xc8] sm:$0xff]
    %v1362 = vld [vmem:[#allocation5 + $0xd0] sm:$0xff]
    %v1363 = vld [vmem:[#allocation5 + $0xd8] sm:$0xff]
    %v1364 = vld [vmem:[#allocation5 + $0xe0] sm:$0xff]
    %v1365 = vld [vmem:[#allocation5 + $0xe8] sm:$0xff]
    %v1366 = vld [vmem:[#allocation5 + $0xf0] sm:$0xff]
    %v1367 = vld [vmem:[#allocation5 + $0xf8] sm:$0xff]
    %v1368 = vld [vmem:[#allocation5 + $0x100] sm:$0xff]
    %v1369 = vld [vmem:[#allocation5 + $0x108] sm:$0xff]
    %v1370 = vld [vmem:[#allocation5 + $0x110] sm:$0xff]
    %v1371 = vld [vmem:[#allocation5 + $0x118] sm:$0xff]
    %v1372 = vld [vmem:[#allocation5 + $0x120] sm:$0xff]
    %v1373 = vld [vmem:[#allocation5 + $0x128] sm:$0xff]
    %v1374 = vld [vmem:[#allocation5 + $0x130] sm:$0xff]
    %v1375 = vld [vmem:[#allocation5 + $0x138] sm:$0xff]
    %v1376 = vld [vmem:[#allocation5 + $0x140] sm:$0xff]
    %v1377 = vld [vmem:[#allocation5 + $0x148] sm:$0xff]
    %v1378 = vld [vmem:[#allocation5 + $0x150] sm:$0xff]
    %v1379 = vld [vmem:[#allocation5 + $0x158] sm:$0xff]
    %v1380 = vld [vmem:[#allocation5 + $0x160] sm:$0xff]
    %v1381 = vld [vmem:[#allocation5 + $0x168] sm:$0xff]
    %v1382 = vld [vmem:[#allocation5 + $0x170] sm:$0xff]
    %v1383 = vld [vmem:[#allocation5 + $0x178] sm:$0xff]
    %v1384 = vld [vmem:[#allocation5 + $0x180] sm:$0xff]
    %v1385 = vld [vmem:[#allocation5 + $0x188] sm:$0xff]
    %v1386 = vld [vmem:[#allocation5 + $0x190] sm:$0xff]
    %v1387 = vld [vmem:[#allocation5 + $0x198] sm:$0xff]
    %v1388 = vld [vmem:[#allocation5 + $0x1a0] sm:$0xff]
    %v1389 = vld [vmem:[#allocation5 + $0x1a8] sm:$0xff]
    %v1390 = vld [vmem:[#allocation5 + $0x1b0] sm:$0xff]
    %v1391 = vld [vmem:[#allocation5 + $0x1b8] sm:$0xff]
    %v1392 = vld [vmem:[#allocation5 + $0x1c0] sm:$0xff]
    %v1393 = vld [vmem:[#allocation5 + $0x1c8] sm:$0xff]
    %v1394 = vld [vmem:[#allocation5 + $0x1d0] sm:$0xff]
    %v1395 = vld [vmem:[#allocation5 + $0x1d8] sm:$0xff]
    %v1396 = vld [vmem:[#allocation5 + $0x1e0] sm:$0xff]
    %v1397 = vld [vmem:[#allocation5 + $0x1e8] sm:$0xff]
    %v1398 = vld [vmem:[#allocation5 + $0x1f0] sm:$0xff]
    %v1399 = vld [vmem:[#allocation5 + $0x1f8] sm:$0xff]
    %v1400 = vld [vmem:[#allocation5 + $0x200] sm:$0xff]
    %v1401 = vld [vmem:[#allocation5 + $0x208] sm:$0xff]
    %v1402 = vld [vmem:[#allocation5 + $0x210] sm:$0xff]
    %v1403 = vld [vmem:[#allocation5 + $0x218] sm:$0xff]
    %v1404 = vld [vmem:[#allocation5 + $0x220] sm:$0xff]
    %v1405 = vld [vmem:[#allocation5 + $0x228] sm:$0xff]
    %v1406 = vld [vmem:[#allocation5 + $0x230] sm:$0xff]
    %v1407 = vld [vmem:[#allocation5 + $0x238] sm:$0xff]
    %v1408 = vld [vmem:[#allocation5 + $0x240] sm:$0xff]
    %v1409 = vld [vmem:[#allocation5 + $0x248] sm:$0xff]
    %v1410 = vld [vmem:[#allocation5 + $0x250] sm:$0xff]
    %v1411 = vld [vmem:[#allocation5 + $0x258] sm:$0xff]
    %v1412 = vld [vmem:[#allocation5 + $0x260] sm:$0xff]
    %v1413 = vld [vmem:[#allocation5 + $0x268] sm:$0xff]
    %v1414 = vld [vmem:[#allocation5 + $0x270] sm:$0xff]
    %v1415 = vld [vmem:[#allocation5 + $0x278] sm:$0xff]
    %v1416 = vld [vmem:[#allocation5 + $0x280] sm:$0xff]
    %v1417 = vld [vmem:[#allocation5 + $0x288] sm:$0xff]
    %v1418 = vld [vmem:[#allocation5 + $0x290] sm:$0xff]
    %v1419 = vld [vmem:[#allocation5 + $0x298] sm:$0xff]
    %v1420 = vld [vmem:[#allocation5 + $0x2a0] sm:$0xff]
    %v1421 = vld [vmem:[#allocation5 + $0x2a8] sm:$0xff]
    %v1422 = vld [vmem:[#allocation5 + $0x2b0] sm:$0xff]
    %v1423 = vld [vmem:[#allocation5 + $0x2b8] sm:$0xff]
    %v1424 = vld [vmem:[#allocation5 + $0x2c0] sm:$0xff]
    %v1425 = vld [vmem:[#allocation5 + $0x2c8] sm:$0xff]
    %v1426 = vld [vmem:[#allocation5 + $0x2d0] sm:$0xff]
    %v1427 = vld [vmem:[#allocation5 + $0x2d8] sm:$0xff]
    %v1428 = vld [vmem:[#allocation5 + $0x2e0] sm:$0xff]
    %v1429 = vld [vmem:[#allocation5 + $0x2e8] sm:$0xff]
    %v1430 = vld [vmem:[#allocation5 + $0x2f0] sm:$0xff]
    %v1431 = vld [vmem:[#allocation5 + $0x2f8] sm:$0xff]
    %v1432 = vpack.c.b16 %v1246, %v1240
    %v1433 = vpack.c.b16 %v1247, %v1241
    %v1434 = vpack.c.b16 %v1248, %v1242
    %v1435 = vpack.c.b16 %v1249, %v1243
    %v1436 = vpack.c.b16 %v1250, %v1244
    %v1437 = vpack.c.b16 %v1251, %v1245
    %v1438 = vpack.c.b16 %v1258, %v1252
    %v1439 = vpack.c.b16 %v1259, %v1253
    %v1440 = vpack.c.b16 %v1260, %v1254
    %v1441 = vpack.c.b16 %v1261, %v1255
    %v1442 = vpack.c.b16 %v1262, %v1256
    %v1443 = vpack.c.b16 %v1263, %v1257
    %v1444 = vpack.c.b16 %v1270, %v1264
    %v1445 = vpack.c.b16 %v1271, %v1265
    %v1446 = vpack.c.b16 %v1272, %v1266
    %v1447 = vpack.c.b16 %v1273, %v1267
    %v1448 = vpack.c.b16 %v1274, %v1268
    %v1449 = vpack.c.b16 %v1275, %v1269
    %v1450 = vpack.c.b16 %v1282, %v1276
    %v1451 = vpack.c.b16 %v1283, %v1277
    %v1452 = vpack.c.b16 %v1284, %v1278
    %v1453 = vpack.c.b16 %v1285, %v1279
    %v1454 = vpack.c.b16 %v1286, %v1280
    %v1455 = vpack.c.b16 %v1287, %v1281
    %v1456 = vpack.c.b16 %v1294, %v1288
    %v1457 = vpack.c.b16 %v1295, %v1289
    %v1458 = vpack.c.b16 %v1296, %v1290
    %v1459 = vpack.c.b16 %v1297, %v1291
    %v1460 = vpack.c.b16 %v1298, %v1292
    %v1461 = vpack.c.b16 %v1299, %v1293
    %v1462 = vpack.c.b16 %v1306, %v1300
    %v1463 = vpack.c.b16 %v1307, %v1301
    %v1464 = vpack.c.b16 %v1308, %v1302
    %v1465 = vpack.c.b16 %v1309, %v1303
    %v1466 = vpack.c.b16 %v1310, %v1304
    %v1467 = vpack.c.b16 %v1311, %v1305
    %v1468 = vpack.c.b16 %v1318, %v1312
    %v1469 = vpack.c.b16 %v1319, %v1313
    %v1470 = vpack.c.b16 %v1320, %v1314
    %v1471 = vpack.c.b16 %v1321, %v1315
    %v1472 = vpack.c.b16 %v1322, %v1316
    %v1473 = vpack.c.b16 %v1323, %v1317
    %v1474 = vpack.c.b16 %v1330, %v1324
    %v1475 = vpack.c.b16 %v1331, %v1325
    %v1476 = vpack.c.b16 %v1332, %v1326
    %v1477 = vpack.c.b16 %v1333, %v1327
    %v1478 = vpack.c.b16 %v1334, %v1328
    %v1479 = vpack.c.b16 %v1335, %v1329
    %v1624 = vunpack.c.l.b16 %v1336
    %v1625 = vunpack.c.h.b16 %v1336
    %v1626 = vunpack.c.l.b16 %v1337
    %v1627 = vunpack.c.h.b16 %v1337
    %v1628 = vunpack.c.l.b16 %v1338
    %v1629 = vunpack.c.h.b16 %v1338
    %v1630 = vunpack.c.l.b16 %v1339
    %v1631 = vunpack.c.h.b16 %v1339
    %v1632 = vunpack.c.l.b16 %v1340
    %v1633 = vunpack.c.h.b16 %v1340
    %v1634 = vunpack.c.l.b16 %v1341
    %v1635 = vunpack.c.h.b16 %v1341
    %v1636 = vunpack.c.l.b16 %v1342
    %v1637 = vunpack.c.h.b16 %v1342
    %v1638 = vunpack.c.l.b16 %v1343
    %v1639 = vunpack.c.h.b16 %v1343
    %v1640 = vunpack.c.l.b16 %v1344
    %v1641 = vunpack.c.h.b16 %v1344
    %v1642 = vunpack.c.l.b16 %v1345
    %v1643 = vunpack.c.h.b16 %v1345
    %v1644 = vunpack.c.l.b16 %v1346
    %v1645 = vunpack.c.h.b16 %v1346
    %v1646 = vunpack.c.l.b16 %v1347
    %v1647 = vunpack.c.h.b16 %v1347
    %v1648 = vunpack.c.l.b16 %v1348
    %v1649 = vunpack.c.h.b16 %v1348
    %v1650 = vunpack.c.l.b16 %v1349
    %v1651 = vunpack.c.h.b16 %v1349
    %v1652 = vunpack.c.l.b16 %v1350
    %v1653 = vunpack.c.h.b16 %v1350
    %v1654 = vunpack.c.l.b16 %v1351
    %v1655 = vunpack.c.h.b16 %v1351
    %v1656 = vunpack.c.l.b16 %v1352
    %v1657 = vunpack.c.h.b16 %v1352
    %v1658 = vunpack.c.l.b16 %v1353
    %v1659 = vunpack.c.h.b16 %v1353
    %v1660 = vunpack.c.l.b16 %v1354
    %v1661 = vunpack.c.h.b16 %v1354
    %v1662 = vunpack.c.l.b16 %v1355
    %v1663 = vunpack.c.h.b16 %v1355
    %v1664 = vunpack.c.l.b16 %v1356
    %v1665 = vunpack.c.h.b16 %v1356
    %v1666 = vunpack.c.l.b16 %v1357
    %v1667 = vunpack.c.h.b16 %v1357
    %v1668 = vunpack.c.l.b16 %v1358
    %v1669 = vunpack.c.h.b16 %v1358
    %v1670 = vunpack.c.l.b16 %v1359
    %v1671 = vunpack.c.h.b16 %v1359
    %v1672 = vunpack.c.l.b16 %v1360
    %v1673 = vunpack.c.h.b16 %v1360
    %v1674 = vunpack.c.l.b16 %v1361
    %v1675 = vunpack.c.h.b16 %v1361
    %v1676 = vunpack.c.l.b16 %v1362
    %v1677 = vunpack.c.h.b16 %v1362
    %v1678 = vunpack.c.l.b16 %v1363
    %v1679 = vunpack.c.h.b16 %v1363
    %v1680 = vunpack.c.l.b16 %v1364
    %v1681 = vunpack.c.h.b16 %v1364
    %v1682 = vunpack.c.l.b16 %v1365
    %v1683 = vunpack.c.h.b16 %v1365
    %v1684 = vunpack.c.l.b16 %v1366
    %v1685 = vunpack.c.h.b16 %v1366
    %v1686 = vunpack.c.l.b16 %v1367
    %v1687 = vunpack.c.h.b16 %v1367
    %v1688 = vunpack.c.l.b16 %v1368
    %v1689 = vunpack.c.h.b16 %v1368
    %v1690 = vunpack.c.l.b16 %v1369
    %v1691 = vunpack.c.h.b16 %v1369
    %v1692 = vunpack.c.l.b16 %v1370
    %v1693 = vunpack.c.h.b16 %v1370
    %v1694 = vunpack.c.l.b16 %v1371
    %v1695 = vunpack.c.h.b16 %v1371
    %v1696 = vunpack.c.l.b16 %v1372
    %v1697 = vunpack.c.h.b16 %v1372
    %v1698 = vunpack.c.l.b16 %v1373
    %v1699 = vunpack.c.h.b16 %v1373
    %v1700 = vunpack.c.l.b16 %v1374
    %v1701 = vunpack.c.h.b16 %v1374
    %v1702 = vunpack.c.l.b16 %v1375
    %v1703 = vunpack.c.h.b16 %v1375
    %v1704 = vunpack.c.l.b16 %v1376
    %v1705 = vunpack.c.h.b16 %v1376
    %v1706 = vunpack.c.l.b16 %v1377
    %v1707 = vunpack.c.h.b16 %v1377
    %v1708 = vunpack.c.l.b16 %v1378
    %v1709 = vunpack.c.h.b16 %v1378
    %v1710 = vunpack.c.l.b16 %v1379
    %v1711 = vunpack.c.h.b16 %v1379
    %v1712 = vunpack.c.l.b16 %v1380
    %v1713 = vunpack.c.h.b16 %v1380
    %v1714 = vunpack.c.l.b16 %v1381
    %v1715 = vunpack.c.h.b16 %v1381
    %v1716 = vunpack.c.l.b16 %v1382
    %v1717 = vunpack.c.h.b16 %v1382
    %v1718 = vunpack.c.l.b16 %v1383
    %v1719 = vunpack.c.h.b16 %v1383
    %v1720 = vunpack.c.l.b16 %v1384
    %v1721 = vunpack.c.h.b16 %v1384
    %v1722 = vunpack.c.l.b16 %v1385
    %v1723 = vunpack.c.h.b16 %v1385
    %v1724 = vunpack.c.l.b16 %v1386
    %v1725 = vunpack.c.h.b16 %v1386
    %v1726 = vunpack.c.l.b16 %v1387
    %v1727 = vunpack.c.h.b16 %v1387
    %v1728 = vunpack.c.l.b16 %v1388
    %v1729 = vunpack.c.h.b16 %v1388
    %v1730 = vunpack.c.l.b16 %v1389
    %v1731 = vunpack.c.h.b16 %v1389
    %v1732 = vunpack.c.l.b16 %v1390
    %v1733 = vunpack.c.h.b16 %v1390
    %v1734 = vunpack.c.l.b16 %v1391
    %v1735 = vunpack.c.h.b16 %v1391
    %v1736 = vunpack.c.l.b16 %v1392
    %v1737 = vunpack.c.h.b16 %v1392
    %v1738 = vunpack.c.l.b16 %v1393
    %v1739 = vunpack.c.h.b16 %v1393
    %v1740 = vunpack.c.l.b16 %v1394
    %v1741 = vunpack.c.h.b16 %v1394
    %v1742 = vunpack.c.l.b16 %v1395
    %v1743 = vunpack.c.h.b16 %v1395
    %v1744 = vunpack.c.l.b16 %v1396
    %v1745 = vunpack.c.h.b16 %v1396
    %v1746 = vunpack.c.l.b16 %v1397
    %v1747 = vunpack.c.h.b16 %v1397
    %v1748 = vunpack.c.l.b16 %v1398
    %v1749 = vunpack.c.h.b16 %v1398
    %v1750 = vunpack.c.l.b16 %v1399
    %v1751 = vunpack.c.h.b16 %v1399
    %v1752 = vunpack.c.l.b16 %v1400
    %v1753 = vunpack.c.h.b16 %v1400
    %v1754 = vunpack.c.l.b16 %v1401
    %v1755 = vunpack.c.h.b16 %v1401
    %v1756 = vunpack.c.l.b16 %v1402
    %v1757 = vunpack.c.h.b16 %v1402
    %v1758 = vunpack.c.l.b16 %v1403
    %v1759 = vunpack.c.h.b16 %v1403
    %v1760 = vunpack.c.l.b16 %v1404
    %v1761 = vunpack.c.h.b16 %v1404
    %v1762 = vunpack.c.l.b16 %v1405
    %v1763 = vunpack.c.h.b16 %v1405
    %v1764 = vunpack.c.l.b16 %v1406
    %v1765 = vunpack.c.h.b16 %v1406
    %v1766 = vunpack.c.l.b16 %v1407
    %v1767 = vunpack.c.h.b16 %v1407
    %v1768 = vunpack.c.l.b16 %v1408
    %v1769 = vunpack.c.h.b16 %v1408
    %v1770 = vunpack.c.l.b16 %v1409
    %v1771 = vunpack.c.h.b16 %v1409
    %v1772 = vunpack.c.l.b16 %v1410
    %v1773 = vunpack.c.h.b16 %v1410
    %v1774 = vunpack.c.l.b16 %v1411
    %v1775 = vunpack.c.h.b16 %v1411
    %v1776 = vunpack.c.l.b16 %v1412
    %v1777 = vunpack.c.h.b16 %v1412
    %v1778 = vunpack.c.l.b16 %v1413
    %v1779 = vunpack.c.h.b16 %v1413
    %v1780 = vunpack.c.l.b16 %v1414
    %v1781 = vunpack.c.h.b16 %v1414
    %v1782 = vunpack.c.l.b16 %v1415
    %v1783 = vunpack.c.h.b16 %v1415
    %v1784 = vunpack.c.l.b16 %v1416
    %v1785 = vunpack.c.h.b16 %v1416
    %v1786 = vunpack.c.l.b16 %v1417
    %v1787 = vunpack.c.h.b16 %v1417
    %v1788 = vunpack.c.l.b16 %v1418
    %v1789 = vunpack.c.h.b16 %v1418
    %v1790 = vunpack.c.l.b16 %v1419
    %v1791 = vunpack.c.h.b16 %v1419
    %v1792 = vunpack.c.l.b16 %v1420
    %v1793 = vunpack.c.h.b16 %v1420
    %v1794 = vunpack.c.l.b16 %v1421
    %v1795 = vunpack.c.h.b16 %v1421
    %v1796 = vunpack.c.l.b16 %v1422
    %v1797 = vunpack.c.h.b16 %v1422
    %v1798 = vunpack.c.l.b16 %v1423
    %v1799 = vunpack.c.h.b16 %v1423
    %v1800 = vunpack.c.l.b16 %v1424
    %v1801 = vunpack.c.h.b16 %v1424
    %v1802 = vunpack.c.l.b16 %v1425
    %v1803 = vunpack.c.h.b16 %v1425
    %v1804 = vunpack.c.l.b16 %v1426
    %v1805 = vunpack.c.h.b16 %v1426
    %v1806 = vunpack.c.l.b16 %v1427
    %v1807 = vunpack.c.h.b16 %v1427
    %v1808 = vunpack.c.l.b16 %v1428
    %v1809 = vunpack.c.h.b16 %v1428
    %v1810 = vunpack.c.l.b16 %v1429
    %v1811 = vunpack.c.h.b16 %v1429
    %v1812 = vunpack.c.l.b16 %v1430
    %v1813 = vunpack.c.h.b16 %v1430
    %v1814 = vunpack.c.l.b16 %v1431
    %v1815 = vunpack.c.h.b16 %v1431
    %v1816 = vpack.c.b16 %v1626, %v1624
    %v1817 = vpack.c.b16 %v1627, %v1625
    %v1818 = vpack.c.b16 %v1630, %v1628
    %v1819 = vpack.c.b16 %v1631, %v1629
    %v1820 = vpack.c.b16 %v1634, %v1632
    %v1821 = vpack.c.b16 %v1635, %v1633
    %v1822 = vpack.c.b16 %v1638, %v1636
    %v1823 = vpack.c.b16 %v1639, %v1637
    %v1824 = vpack.c.b16 %v1642, %v1640
    %v1825 = vpack.c.b16 %v1643, %v1641
    %v1826 = vpack.c.b16 %v1646, %v1644
    %v1827 = vpack.c.b16 %v1647, %v1645
    %v1828 = vpack.c.b16 %v1650, %v1648
    %v1829 = vpack.c.b16 %v1651, %v1649
    %v1830 = vpack.c.b16 %v1654, %v1652
    %v1831 = vpack.c.b16 %v1655, %v1653
    %v1832 = vpack.c.b16 %v1658, %v1656
    %v1833 = vpack.c.b16 %v1659, %v1657
    %v1834 = vpack.c.b16 %v1662, %v1660
    %v1835 = vpack.c.b16 %v1663, %v1661
    %v1836 = vpack.c.b16 %v1666, %v1664
    %v1837 = vpack.c.b16 %v1667, %v1665
    %v1838 = vpack.c.b16 %v1670, %v1668
    %v1839 = vpack.c.b16 %v1671, %v1669
    %v1840 = vpack.c.b16 %v1674, %v1672
    %v1841 = vpack.c.b16 %v1675, %v1673
    %v1842 = vpack.c.b16 %v1678, %v1676
    %v1843 = vpack.c.b16 %v1679, %v1677
    %v1844 = vpack.c.b16 %v1682, %v1680
    %v1845 = vpack.c.b16 %v1683, %v1681
    %v1846 = vpack.c.b16 %v1686, %v1684
    %v1847 = vpack.c.b16 %v1687, %v1685
    %v1848 = vpack.c.b16 %v1690, %v1688
    %v1849 = vpack.c.b16 %v1691, %v1689
    %v1850 = vpack.c.b16 %v1694, %v1692
    %v1851 = vpack.c.b16 %v1695, %v1693
    %v1852 = vpack.c.b16 %v1698, %v1696
    %v1853 = vpack.c.b16 %v1699, %v1697
    %v1854 = vpack.c.b16 %v1702, %v1700
    %v1855 = vpack.c.b16 %v1703, %v1701
    %v1856 = vpack.c.b16 %v1706, %v1704
    %v1857 = vpack.c.b16 %v1707, %v1705
    %v1858 = vpack.c.b16 %v1710, %v1708
    %v1859 = vpack.c.b16 %v1711, %v1709
    %v1860 = vpack.c.b16 %v1714, %v1712
    %v1861 = vpack.c.b16 %v1715, %v1713
    %v1862 = vpack.c.b16 %v1718, %v1716
    %v1863 = vpack.c.b16 %v1719, %v1717
    %v1864 = vpack.c.b16 %v1722, %v1720
    %v1865 = vpack.c.b16 %v1723, %v1721
    %v1866 = vpack.c.b16 %v1726, %v1724
    %v1867 = vpack.c.b16 %v1727, %v1725
    %v1868 = vpack.c.b16 %v1730, %v1728
    %v1869 = vpack.c.b16 %v1731, %v1729
    %v1870 = vpack.c.b16 %v1734, %v1732
    %v1871 = vpack.c.b16 %v1735, %v1733
    %v1872 = vpack.c.b16 %v1738, %v1736
    %v1873 = vpack.c.b16 %v1739, %v1737
    %v1874 = vpack.c.b16 %v1742, %v1740
    %v1875 = vpack.c.b16 %v1743, %v1741
    %v1876 = vpack.c.b16 %v1746, %v1744
    %v1877 = vpack.c.b16 %v1747, %v1745
    %v1878 = vpack.c.b16 %v1750, %v1748
    %v1879 = vpack.c.b16 %v1751, %v1749
    %v1880 = vpack.c.b16 %v1754, %v1752
    %v1881 = vpack.c.b16 %v1755, %v1753
    %v1882 = vpack.c.b16 %v1758, %v1756
    %v1883 = vpack.c.b16 %v1759, %v1757
    %v1884 = vpack.c.b16 %v1762, %v1760
    %v1885 = vpack.c.b16 %v1763, %v1761
    %v1886 = vpack.c.b16 %v1766, %v1764
    %v1887 = vpack.c.b16 %v1767, %v1765
    %v1888 = vpack.c.b16 %v1770, %v1768
    %v1889 = vpack.c.b16 %v1771, %v1769
    %v1890 = vpack.c.b16 %v1774, %v1772
    %v1891 = vpack.c.b16 %v1775, %v1773
    %v1892 = vpack.c.b16 %v1778, %v1776
    %v1893 = vpack.c.b16 %v1779, %v1777
    %v1894 = vpack.c.b16 %v1782, %v1780
    %v1895 = vpack.c.b16 %v1783, %v1781
    %v1896 = vpack.c.b16 %v1786, %v1784
    %v1897 = vpack.c.b16 %v1787, %v1785
    %v1898 = vpack.c.b16 %v1790, %v1788
    %v1899 = vpack.c.b16 %v1791, %v1789
    %v1900 = vpack.c.b16 %v1794, %v1792
    %v1901 = vpack.c.b16 %v1795, %v1793
    %v1902 = vpack.c.b16 %v1798, %v1796
    %v1903 = vpack.c.b16 %v1799, %v1797
    %v1904 = vpack.c.b16 %v1802, %v1800
    %v1905 = vpack.c.b16 %v1803, %v1801
    %v1906 = vpack.c.b16 %v1806, %v1804
    %v1907 = vpack.c.b16 %v1807, %v1805
    %v1908 = vpack.c.b16 %v1810, %v1808
    %v1909 = vpack.c.b16 %v1811, %v1809
    %v1910 = vpack.c.b16 %v1814, %v1812
    %v1911 = vpack.c.b16 %v1815, %v1813
    %2008 = vmatprep.subr.bf16.mxu0 %v1831
    %2009 = vmatpush1.bf16.msra.mxu0 %v1830
    %2010 = vmatprep.subr.bf16.mxu0 %v1829
    %2011 = vmatpush1.bf16.msra.mxu0 %v1828
    %2012 = vmatprep.subr.bf16.mxu0 %v1827
    %2013 = vmatpush1.bf16.msra.mxu0 %v1826
    %2014 = vmatprep.subr.bf16.mxu0 %v1825
    %2015 = vmatpush1.bf16.msra.mxu0 %v1824
    %2016 = vmatprep.subr.bf16.mxu0 %v1823
    %2017 = vmatpush1.bf16.msra.mxu0 %v1822
    %2018 = vmatprep.subr.bf16.mxu0 %v1821
    %2019 = vmatpush1.bf16.msra.mxu0 %v1820
    %2020 = vmatprep.subr.bf16.mxu0 %v1819
    %2021 = vmatpush1.bf16.msra.mxu0 %v1818
    %2022 = vmatprep.subr.bf16.mxu0 %v1817
    %2023 = vmatpush1.bf16.msra.mxu0 %v1816
    %2024 = vmatprep.subr.bf16.mxu0 %v1847
    %2025 = vmatpush2.bf16.msra.mxu0 %v1846
    %2026 = vmatprep.subr.bf16.mxu0 %v1845
    %2027 = vmatpush2.bf16.msra.mxu0 %v1844
    %2028 = vmatprep.subr.bf16.mxu0 %v1843
    %2029 = vmatpush2.bf16.msra.mxu0 %v1842
    %2030 = vmatprep.subr.bf16.mxu0 %v1841
    %2031 = vmatpush2.bf16.msra.mxu0 %v1840
    %2032 = vmatprep.subr.bf16.mxu0 %v1839
    %2033 = vmatpush2.bf16.msra.mxu0 %v1838
    %2034 = vmatprep.subr.bf16.mxu0 %v1837
    %2035 = vmatpush2.bf16.msra.mxu0 %v1836
    %2036 = vmatprep.subr.bf16.mxu0 %v1835
    %2037 = vmatpush2.bf16.msra.mxu0 %v1834
    %2038 = vmatprep.subr.bf16.mxu0 %v1833
    %2039 = vmatpush2.bf16.msra.mxu0 %v1832
    %2040 = vmatprep.mubr.bf16.mxu0 %v1433
    %2041 = vmatmul.mubr.bf16.gmra.mxu0 %v1432
    %v2042 = vpop.f32.mrf.mxu0
    %v2043 = vadd.f32 0.0, %v2042
    %v2044 = vpop.f32.mrf.mxu0
    %v2045 = vadd.f32 0.0, %v2044
    %v2046 = vpop.f32.mrf.mxu0
    %v2047 = vadd.f32 0.0, %v2046
    %v2048 = vpop.f32.mrf.mxu0
    %v2049 = vadd.f32 0.0, %v2048
    %2050 = vmatprep.mubr.bf16.mxu0 %v1439
    %2051 = vmatmul.mubr.bf16.gmra.mxu0 %v1438
    %v2052 = vpop.f32.mrf.mxu0
    %v2053 = vadd.f32 0.0, %v2052
    %v2054 = vpop.f32.mrf.mxu0
    %v2055 = vadd.f32 0.0, %v2054
    %v2056 = vpop.f32.mrf.mxu0
    %v2057 = vadd.f32 0.0, %v2056
    %v2058 = vpop.f32.mrf.mxu0
    %v2059 = vadd.f32 0.0, %v2058
    %2060 = vmatprep.mubr.bf16.mxu0 %v1445
    %2061 = vmatmul.mubr.bf16.gmra.mxu0 %v1444
    %v2062 = vpop.f32.mrf.mxu0
    %v2063 = vadd.f32 0.0, %v2062
    %v2064 = vpop.f32.mrf.mxu0
    %v2065 = vadd.f32 0.0, %v2064
    %v2066 = vpop.f32.mrf.mxu0
    %v2067 = vadd.f32 0.0, %v2066
    %v2068 = vpop.f32.mrf.mxu0
    %v2069 = vadd.f32 0.0, %v2068
    %2070 = vmatprep.mubr.bf16.mxu0 %v1451
    %2071 = vmatmul.mubr.bf16.gmra.mxu0 %v1450
    %v2072 = vpop.f32.mrf.mxu0
    %v2073 = vadd.f32 0.0, %v2072
    %v2074 = vpop.f32.mrf.mxu0
    %v2075 = vadd.f32 0.0, %v2074
    %v2076 = vpop.f32.mrf.mxu0
    %v2077 = vadd.f32 0.0, %v2076
    %v2078 = vpop.f32.mrf.mxu0
    %v2079 = vadd.f32 0.0, %v2078
    %2080 = vmatprep.mubr.bf16.mxu0 %v1457
    %2081 = vmatmul.mubr.bf16.gmra.mxu0 %v1456
    %v2082 = vpop.f32.mrf.mxu0
    %v2083 = vadd.f32 0.0, %v2082
    %v2084 = vpop.f32.mrf.mxu0
    %v2085 = vadd.f32 0.0, %v2084
    %v2086 = vpop.f32.mrf.mxu0
    %v2087 = vadd.f32 0.0, %v2086
    %v2088 = vpop.f32.mrf.mxu0
    %v2089 = vadd.f32 0.0, %v2088
    %2090 = vmatprep.mubr.bf16.mxu0 %v1463
    %2091 = vmatmul.mubr.bf16.gmra.mxu0 %v1462
    %v2092 = vpop.f32.mrf.mxu0
    %v2093 = vadd.f32 0.0, %v2092
    %v2094 = vpop.f32.mrf.mxu0
    %v2095 = vadd.f32 0.0, %v2094
    %v2096 = vpop.f32.mrf.mxu0
    %v2097 = vadd.f32 0.0, %v2096
    %v2098 = vpop.f32.mrf.mxu0
    %v2099 = vadd.f32 0.0, %v2098
    %2100 = vmatprep.mubr.bf16.mxu0 %v1469
    %2101 = vmatmul.mubr.bf16.gmra.mxu0 %v1468
    %v2102 = vpop.f32.mrf.mxu0
    %v2103 = vadd.f32 0.0, %v2102
    %v2104 = vpop.f32.mrf.mxu0
    %v2105 = vadd.f32 0.0, %v2104
    %v2106 = vpop.f32.mrf.mxu0
    %v2107 = vadd.f32 0.0, %v2106
    %v2108 = vpop.f32.mrf.mxu0
    %v2109 = vadd.f32 0.0, %v2108
    %2110 = vmatprep.mubr.bf16.mxu0 %v1475
    %2111 = vmatmul.mubr.bf16.gmra.mxu0 %v1474
    %v2112 = vpop.f32.mrf.mxu0
    %v2113 = vadd.f32 0.0, %v2112
    %v2114 = vpop.f32.mrf.mxu0
    %v2115 = vadd.f32 0.0, %v2114
    %v2116 = vpop.f32.mrf.mxu0
    %v2117 = vadd.f32 0.0, %v2116
    %v2118 = vpop.f32.mrf.mxu0
    %v2119 = vadd.f32 0.0, %v2118
    %2120 = vdwg.mxu0
    %2121 = vmatprep.subr.bf16.mxu0 %v1863
    %2122 = vmatpush1.bf16.msra.mxu0 %v1862
    %2123 = vmatprep.subr.bf16.mxu0 %v1861
    %2124 = vmatpush1.bf16.msra.mxu0 %v1860
    %2125 = vmatprep.subr.bf16.mxu0 %v1859
    %2126 = vmatpush1.bf16.msra.mxu0 %v1858
    %2127 = vmatprep.subr.bf16.mxu0 %v1857
    %2128 = vmatpush1.bf16.msra.mxu0 %v1856
    %2129 = vmatprep.subr.bf16.mxu0 %v1855
    %2130 = vmatpush1.bf16.msra.mxu0 %v1854
    %2131 = vmatprep.subr.bf16.mxu0 %v1853
    %2132 = vmatpush1.bf16.msra.mxu0 %v1852
    %2133 = vmatprep.subr.bf16.mxu0 %v1851
    %2134 = vmatpush1.bf16.msra.mxu0 %v1850
    %2135 = vmatprep.subr.bf16.mxu0 %v1849
    %2136 = vmatpush1.bf16.msra.mxu0 %v1848
    %2137 = vmatprep.subr.bf16.mxu0 %v1879
    %2138 = vmatpush2.bf16.msra.mxu0 %v1878
    %2139 = vmatprep.subr.bf16.mxu0 %v1877
    %2140 = vmatpush2.bf16.msra.mxu0 %v1876
    %2141 = vmatprep.subr.bf16.mxu0 %v1875
    %2142 = vmatpush2.bf16.msra.mxu0 %v1874
    %2143 = vmatprep.subr.bf16.mxu0 %v1873
    %2144 = vmatpush2.bf16.msra.mxu0 %v1872
    %2145 = vmatprep.subr.bf16.mxu0 %v1871
    %2146 = vmatpush2.bf16.msra.mxu0 %v1870
    %2147 = vmatprep.subr.bf16.mxu0 %v1869
    %2148 = vmatpush2.bf16.msra.mxu0 %v1868
    %2149 = vmatprep.subr.bf16.mxu0 %v1867
    %2150 = vmatpush2.bf16.msra.mxu0 %v1866
    %2151 = vmatprep.subr.bf16.mxu0 %v1865
    %2152 = vmatpush2.bf16.msra.mxu0 %v1864
    %2153 = vmatprep.mubr.bf16.mxu0 %v1435
    %2154 = vmatmul.mubr.bf16.gmra.mxu0 %v1434
    %v2155 = vpop.f32.mrf.mxu0
    %v2156 = vadd.f32 %v2043, %v2155
    %v2157 = vpop.f32.mrf.mxu0
    %v2158 = vadd.f32 %v2045, %v2157
    %v2159 = vpop.f32.mrf.mxu0
    %v2160 = vadd.f32 %v2047, %v2159
    %v2161 = vpop.f32.mrf.mxu0
    %v2162 = vadd.f32 %v2049, %v2161
    %2163 = vmatprep.mubr.bf16.mxu0 %v1441
    %2164 = vmatmul.mubr.bf16.gmra.mxu0 %v1440
    %v2165 = vpop.f32.mrf.mxu0
    %v2166 = vadd.f32 %v2053, %v2165
    %v2167 = vpop.f32.mrf.mxu0
    %v2168 = vadd.f32 %v2055, %v2167
    %v2169 = vpop.f32.mrf.mxu0
    %v2170 = vadd.f32 %v2057, %v2169
    %v2171 = vpop.f32.mrf.mxu0
    %v2172 = vadd.f32 %v2059, %v2171
    %2173 = vmatprep.mubr.bf16.mxu0 %v1447
    %2174 = vmatmul.mubr.bf16.gmra.mxu0 %v1446
    %v2175 = vpop.f32.mrf.mxu0
    %v2176 = vadd.f32 %v2063, %v2175
    %v2177 = vpop.f32.mrf.mxu0
    %v2178 = vadd.f32 %v2065, %v2177
    %v2179 = vpop.f32.mrf.mxu0
    %v2180 = vadd.f32 %v2067, %v2179
    %v2181 = vpop.f32.mrf.mxu0
    %v2182 = vadd.f32 %v2069, %v2181
    %2183 = vmatprep.mubr.bf16.mxu0 %v1453
    %2184 = vmatmul.mubr.bf16.gmra.mxu0 %v1452
    %v2185 = vpop.f32.mrf.mxu0
    %v2186 = vadd.f32 %v2073, %v2185
    %v2187 = vpop.f32.mrf.mxu0
    %v2188 = vadd.f32 %v2075, %v2187
    %v2189 = vpop.f32.mrf.mxu0
    %v2190 = vadd.f32 %v2077, %v2189
    %v2191 = vpop.f32.mrf.mxu0
    %v2192 = vadd.f32 %v2079, %v2191
    %2193 = vmatprep.mubr.bf16.mxu0 %v1459
    %2194 = vmatmul.mubr.bf16.gmra.mxu0 %v1458
    %v2195 = vpop.f32.mrf.mxu0
    %v2196 = vadd.f32 %v2083, %v2195
    %v2197 = vpop.f32.mrf.mxu0
    %v2198 = vadd.f32 %v2085, %v2197
    %v2199 = vpop.f32.mrf.mxu0
    %v2200 = vadd.f32 %v2087, %v2199
    %v2201 = vpop.f32.mrf.mxu0
    %v2202 = vadd.f32 %v2089, %v2201
    %2203 = vmatprep.mubr.bf16.mxu0 %v1465
    %2204 = vmatmul.mubr.bf16.gmra.mxu0 %v1464
    %v2205 = vpop.f32.mrf.mxu0
    %v2206 = vadd.f32 %v2093, %v2205
    %v2207 = vpop.f32.mrf.mxu0
    %v2208 = vadd.f32 %v2095, %v2207
    %v2209 = vpop.f32.mrf.mxu0
    %v2210 = vadd.f32 %v2097, %v2209
    %v2211 = vpop.f32.mrf.mxu0
    %v2212 = vadd.f32 %v2099, %v2211
    %2213 = vmatprep.mubr.bf16.mxu0 %v1471
    %2214 = vmatmul.mubr.bf16.gmra.mxu0 %v1470
    %v2215 = vpop.f32.mrf.mxu0
    %v2216 = vadd.f32 %v2103, %v2215
    %v2217 = vpop.f32.mrf.mxu0
    %v2218 = vadd.f32 %v2105, %v2217
    %v2219 = vpop.f32.mrf.mxu0
    %v2220 = vadd.f32 %v2107, %v2219
    %v2221 = vpop.f32.mrf.mxu0
    %v2222 = vadd.f32 %v2109, %v2221
    %2223 = vmatprep.mubr.bf16.mxu0 %v1477
    %2224 = vmatmul.mubr.bf16.gmra.mxu0 %v1476
    %v2225 = vpop.f32.mrf.mxu0
    %v2226 = vadd.f32 %v2113, %v2225
    %v2227 = vpop.f32.mrf.mxu0
    %v2228 = vadd.f32 %v2115, %v2227
    %v2229 = vpop.f32.mrf.mxu0
    %v2230 = vadd.f32 %v2117, %v2229
    %v2231 = vpop.f32.mrf.mxu0
    %v2232 = vadd.f32 %v2119, %v2231
    %2233 = vdwg.mxu0
    %2234 = vmatprep.subr.bf16.mxu0 %v1895
    %2235 = vmatpush1.bf16.msra.mxu0 %v1894
    %2236 = vmatprep.subr.bf16.mxu0 %v1893
    %2237 = vmatpush1.bf16.msra.mxu0 %v1892
    %2238 = vmatprep.subr.bf16.mxu0 %v1891
    %2239 = vmatpush1.bf16.msra.mxu0 %v1890
    %2240 = vmatprep.subr.bf16.mxu0 %v1889
    %2241 = vmatpush1.bf16.msra.mxu0 %v1888
    %2242 = vmatprep.subr.bf16.mxu0 %v1887
    %2243 = vmatpush1.bf16.msra.mxu0 %v1886
    %2244 = vmatprep.subr.bf16.mxu0 %v1885
    %2245 = vmatpush1.bf16.msra.mxu0 %v1884
    %2246 = vmatprep.subr.bf16.mxu0 %v1883
    %2247 = vmatpush1.bf16.msra.mxu0 %v1882
    %2248 = vmatprep.subr.bf16.mxu0 %v1881
    %2249 = vmatpush1.bf16.msra.mxu0 %v1880
    %2250 = vmatprep.subr.bf16.mxu0 %v1911
    %2251 = vmatpush2.bf16.msra.mxu0 %v1910
    %2252 = vmatprep.subr.bf16.mxu0 %v1909
    %2253 = vmatpush2.bf16.msra.mxu0 %v1908
    %2254 = vmatprep.subr.bf16.mxu0 %v1907
    %2255 = vmatpush2.bf16.msra.mxu0 %v1906
    %2256 = vmatprep.subr.bf16.mxu0 %v1905
    %2257 = vmatpush2.bf16.msra.mxu0 %v1904
    %2258 = vmatprep.subr.bf16.mxu0 %v1903
    %2259 = vmatpush2.bf16.msra.mxu0 %v1902
    %2260 = vmatprep.subr.bf16.mxu0 %v1901
    %2261 = vmatpush2.bf16.msra.mxu0 %v1900
    %2262 = vmatprep.subr.bf16.mxu0 %v1899
    %2263 = vmatpush2.bf16.msra.mxu0 %v1898
    %2264 = vmatprep.subr.bf16.mxu0 %v1897
    %2265 = vmatpush2.bf16.msra.mxu0 %v1896
    %2266 = vmatprep.mubr.bf16.mxu0 %v1437
    %2267 = vmatmul.mubr.bf16.gmra.mxu0 %v1436
    %v2268 = vpop.f32.mrf.mxu0
    %v2269 = vadd.f32 %v2156, %v2268
    %v2270 = vpop.f32.mrf.mxu0
    %v2271 = vadd.f32 %v2158, %v2270
    %v2272 = vpop.f32.mrf.mxu0
    %v2273 = vadd.f32 %v2160, %v2272
    %v2274 = vpop.f32.mrf.mxu0
    %v2275 = vadd.f32 %v2162, %v2274
    %2276 = vmatprep.mubr.bf16.mxu0 %v1443
    %2277 = vmatmul.mubr.bf16.gmra.mxu0 %v1442
    %v2278 = vpop.f32.mrf.mxu0
    %v2279 = vadd.f32 %v2166, %v2278
    %v2280 = vpop.f32.mrf.mxu0
    %v2281 = vadd.f32 %v2168, %v2280
    %v2282 = vpop.f32.mrf.mxu0
    %v2283 = vadd.f32 %v2170, %v2282
    %v2284 = vpop.f32.mrf.mxu0
    %v2285 = vadd.f32 %v2172, %v2284
    %2286 = vmatprep.mubr.bf16.mxu0 %v1449
    %2287 = vmatmul.mubr.bf16.gmra.mxu0 %v1448
    %v2288 = vpop.f32.mrf.mxu0
    %v2289 = vadd.f32 %v2176, %v2288
    %v2290 = vpop.f32.mrf.mxu0
    %v2291 = vadd.f32 %v2178, %v2290
    %v2292 = vpop.f32.mrf.mxu0
    %v2293 = vadd.f32 %v2180, %v2292
    %v2294 = vpop.f32.mrf.mxu0
    %v2295 = vadd.f32 %v2182, %v2294
    %2296 = vmatprep.mubr.bf16.mxu0 %v1455
    %2297 = vmatmul.mubr.bf16.gmra.mxu0 %v1454
    %v2298 = vpop.f32.mrf.mxu0
    %v2299 = vadd.f32 %v2186, %v2298
    %v2300 = vpop.f32.mrf.mxu0
    %v2301 = vadd.f32 %v2188, %v2300
    %v2302 = vpop.f32.mrf.mxu0
    %v2303 = vadd.f32 %v2190, %v2302
    %v2304 = vpop.f32.mrf.mxu0
    %v2305 = vadd.f32 %v2192, %v2304
    %2306 = vmatprep.mubr.bf16.mxu0 %v1461
    %2307 = vmatmul.mubr.bf16.gmra.mxu0 %v1460
    %v2308 = vpop.f32.mrf.mxu0
    %v2309 = vadd.f32 %v2196, %v2308
    %v2310 = vpop.f32.mrf.mxu0
    %v2311 = vadd.f32 %v2198, %v2310
    %v2312 = vpop.f32.mrf.mxu0
    %v2313 = vadd.f32 %v2200, %v2312
    %v2314 = vpop.f32.mrf.mxu0
    %v2315 = vadd.f32 %v2202, %v2314
    %2316 = vmatprep.mubr.bf16.mxu0 %v1467
    %2317 = vmatmul.mubr.bf16.gmra.mxu0 %v1466
    %v2318 = vpop.f32.mrf.mxu0
    %v2319 = vadd.f32 %v2206, %v2318
    %v2320 = vpop.f32.mrf.mxu0
    %v2321 = vadd.f32 %v2208, %v2320
    %v2322 = vpop.f32.mrf.mxu0
    %v2323 = vadd.f32 %v2210, %v2322
    %v2324 = vpop.f32.mrf.mxu0
    %v2325 = vadd.f32 %v2212, %v2324
    %2326 = vmatprep.mubr.bf16.mxu0 %v1473
    %2327 = vmatmul.mubr.bf16.gmra.mxu0 %v1472
    %v2328 = vpop.f32.mrf.mxu0
    %v2329 = vadd.f32 %v2216, %v2328
    %v2330 = vpop.f32.mrf.mxu0
    %v2331 = vadd.f32 %v2218, %v2330
    %v2332 = vpop.f32.mrf.mxu0
    %v2333 = vadd.f32 %v2220, %v2332
    %v2334 = vpop.f32.mrf.mxu0
    %v2335 = vadd.f32 %v2222, %v2334
    %2336 = vmatprep.mubr.bf16.mxu0 %v1479
    %2337 = vmatmul.mubr.bf16.gmra.mxu0 %v1478
    %v2338 = vpop.f32.mrf.mxu0
    %v2339 = vadd.f32 %v2226, %v2338
    %v2340 = vpop.f32.mrf.mxu0
    %v2341 = vadd.f32 %v2228, %v2340
    %v2342 = vpop.f32.mrf.mxu0
    %v2343 = vadd.f32 %v2230, %v2342
    %v2344 = vpop.f32.mrf.mxu0
    %v2345 = vadd.f32 %v2232, %v2344
    %2346 = vdwg.mxu0
    %v2347 = vld [vmem:[#allocation7] sm:$0xff]
    %v2348 = vld [vmem:[#allocation7 + $0x8] sm:$0xff]
    %v2349 = vmul.f32 %v2347, %v2269
    %v2350 = vmul.f32 %v2348, %v2271
    %v2351 = vmul.f32 %v2347, %v2273
    %v2352 = vmul.f32 %v2348, %v2275
    %v2353 = vmul.f32 %v2347, %v2279
    %v2354 = vmul.f32 %v2348, %v2281
    %v2355 = vmul.f32 %v2347, %v2283
    %v2356 = vmul.f32 %v2348, %v2285
    %v2357 = vmul.f32 %v2347, %v2289
    %v2358 = vmul.f32 %v2348, %v2291
    %v2359 = vmul.f32 %v2347, %v2293
    %v2360 = vmul.f32 %v2348, %v2295
    %v2361 = vmul.f32 %v2347, %v2299
    %v2362 = vmul.f32 %v2348, %v2301
    %v2363 = vmul.f32 %v2347, %v2303
    %v2364 = vmul.f32 %v2348, %v2305
    %v2365 = vmul.f32 %v2347, %v2309
    %v2366 = vmul.f32 %v2348, %v2311
    %v2367 = vmul.f32 %v2347, %v2313
    %v2368 = vmul.f32 %v2348, %v2315
    %v2369 = vmul.f32 %v2347, %v2319
    %v2370 = vmul.f32 %v2348, %v2321
    %v2371 = vmul.f32 %v2347, %v2323
    %v2372 = vmul.f32 %v2348, %v2325
    %v2373 = vmul.f32 %v2347, %v2329
    %v2374 = vmul.f32 %v2348, %v2331
    %v2375 = vmul.f32 %v2347, %v2333
    %v2376 = vmul.f32 %v2348, %v2335
    %v2377 = vmul.f32 %v2347, %v2339
    %v2378 = vmul.f32 %v2348, %v2341
    %v2379 = vmul.f32 %v2347, %v2343
    %v2380 = vmul.f32 %v2348, %v2345
    %v2381 = vrot.slane %v2349, 4
    %v2382 = vadd.f32 %v2349, %v2381
    %v2383 = vrot.slane %v2382, 2
    %v2384 = vadd.f32 %v2382, %v2383
    %v2385 = vrot.slane %v2384, 1
    %v2386 = vadd.f32 %v2384, %v2385
    %v2387 = vrot.slane %v2350, 4
    %v2388 = vadd.f32 %v2350, %v2387
    %v2389 = vrot.slane %v2388, 2
    %v2390 = vadd.f32 %v2388, %v2389
    %v2391 = vrot.slane %v2390, 1
    %v2392 = vadd.f32 %v2390, %v2391
    %v2393 = vrot.slane %v2351, 4
    %v2394 = vadd.f32 %v2351, %v2393
    %v2395 = vrot.slane %v2394, 2
    %v2396 = vadd.f32 %v2394, %v2395
    %v2397 = vrot.slane %v2396, 1
    %v2398 = vadd.f32 %v2396, %v2397
    %v2399 = vrot.slane %v2352, 4
    %v2400 = vadd.f32 %v2352, %v2399
    %v2401 = vrot.slane %v2400, 2
    %v2402 = vadd.f32 %v2400, %v2401
    %v2403 = vrot.slane %v2402, 1
    %v2404 = vadd.f32 %v2402, %v2403
    %v2405 = vrot.slane %v2353, 4
    %v2406 = vadd.f32 %v2353, %v2405
    %v2407 = vrot.slane %v2406, 2
    %v2408 = vadd.f32 %v2406, %v2407
    %v2409 = vrot.slane %v2408, 1
    %v2410 = vadd.f32 %v2408, %v2409
    %v2411 = vrot.slane %v2354, 4
    %v2412 = vadd.f32 %v2354, %v2411
    %v2413 = vrot.slane %v2412, 2
    %v2414 = vadd.f32 %v2412, %v2413
    %v2415 = vrot.slane %v2414, 1
    %v2416 = vadd.f32 %v2414, %v2415
    %v2417 = vrot.slane %v2355, 4
    %v2418 = vadd.f32 %v2355, %v2417
    %v2419 = vrot.slane %v2418, 2
    %v2420 = vadd.f32 %v2418, %v2419
    %v2421 = vrot.slane %v2420, 1
    %v2422 = vadd.f32 %v2420, %v2421
    %v2423 = vrot.slane %v2356, 4
    %v2424 = vadd.f32 %v2356, %v2423
    %v2425 = vrot.slane %v2424, 2
    %v2426 = vadd.f32 %v2424, %v2425
    %v2427 = vrot.slane %v2426, 1
    %v2428 = vadd.f32 %v2426, %v2427
    %v2429 = vrot.slane %v2357, 4
    %v2430 = vadd.f32 %v2357, %v2429
    %v2431 = vrot.slane %v2430, 2
    %v2432 = vadd.f32 %v2430, %v2431
    %v2433 = vrot.slane %v2432, 1
    %v2434 = vadd.f32 %v2432, %v2433
    %v2435 = vrot.slane %v2358, 4
    %v2436 = vadd.f32 %v2358, %v2435
    %v2437 = vrot.slane %v2436, 2
    %v2438 = vadd.f32 %v2436, %v2437
    %v2439 = vrot.slane %v2438, 1
    %v2440 = vadd.f32 %v2438, %v2439
    %v2441 = vrot.slane %v2359, 4
    %v2442 = vadd.f32 %v2359, %v2441
    %v2443 = vrot.slane %v2442, 2
    %v2444 = vadd.f32 %v2442, %v2443
    %v2445 = vrot.slane %v2444, 1
    %v2446 = vadd.f32 %v2444, %v2445
    %v2447 = vrot.slane %v2360, 4
    %v2448 = vadd.f32 %v2360, %v2447
    %v2449 = vrot.slane %v2448, 2
    %v2450 = vadd.f32 %v2448, %v2449
    %v2451 = vrot.slane %v2450, 1
    %v2452 = vadd.f32 %v2450, %v2451
    %v2453 = vrot.slane %v2361, 4
    %v2454 = vadd.f32 %v2361, %v2453
    %v2455 = vrot.slane %v2454, 2
    %v2456 = vadd.f32 %v2454, %v2455
    %v2457 = vrot.slane %v2456, 1
    %v2458 = vadd.f32 %v2456, %v2457
    %v2459 = vrot.slane %v2362, 4
    %v2460 = vadd.f32 %v2362, %v2459
    %v2461 = vrot.slane %v2460, 2
    %v2462 = vadd.f32 %v2460, %v2461
    %v2463 = vrot.slane %v2462, 1
    %v2464 = vadd.f32 %v2462, %v2463
    %v2465 = vrot.slane %v2363, 4
    %v2466 = vadd.f32 %v2363, %v2465
    %v2467 = vrot.slane %v2466, 2
    %v2468 = vadd.f32 %v2466, %v2467
    %v2469 = vrot.slane %v2468, 1
    %v2470 = vadd.f32 %v2468, %v2469
    %v2471 = vrot.slane %v2364, 4
    %v2472 = vadd.f32 %v2364, %v2471
    %v2473 = vrot.slane %v2472, 2
    %v2474 = vadd.f32 %v2472, %v2473
    %v2475 = vrot.slane %v2474, 1
    %v2476 = vadd.f32 %v2474, %v2475
    %v2477 = vrot.slane %v2365, 4
    %v2478 = vadd.f32 %v2365, %v2477
    %v2479 = vrot.slane %v2478, 2
    %v2480 = vadd.f32 %v2478, %v2479
    %v2481 = vrot.slane %v2480, 1
    %v2482 = vadd.f32 %v2480, %v2481
    %v2483 = vrot.slane %v2366, 4
    %v2484 = vadd.f32 %v2366, %v2483
    %v2485 = vrot.slane %v2484, 2
    %v2486 = vadd.f32 %v2484, %v2485
    %v2487 = vrot.slane %v2486, 1
    %v2488 = vadd.f32 %v2486, %v2487
    %v2489 = vrot.slane %v2367, 4
    %v2490 = vadd.f32 %v2367, %v2489
    %v2491 = vrot.slane %v2490, 2
    %v2492 = vadd.f32 %v2490, %v2491
    %v2493 = vrot.slane %v2492, 1
    %v2494 = vadd.f32 %v2492, %v2493
    %v2495 = vrot.slane %v2368, 4
    %v2496 = vadd.f32 %v2368, %v2495
    %v2497 = vrot.slane %v2496, 2
    %v2498 = vadd.f32 %v2496, %v2497
    %v2499 = vrot.slane %v2498, 1
    %v2500 = vadd.f32 %v2498, %v2499
    %v2501 = vrot.slane %v2369, 4
    %v2502 = vadd.f32 %v2369, %v2501
    %v2503 = vrot.slane %v2502, 2
    %v2504 = vadd.f32 %v2502, %v2503
    %v2505 = vrot.slane %v2504, 1
    %v2506 = vadd.f32 %v2504, %v2505
    %v2507 = vrot.slane %v2370, 4
    %v2508 = vadd.f32 %v2370, %v2507
    %v2509 = vrot.slane %v2508, 2
    %v2510 = vadd.f32 %v2508, %v2509
    %v2511 = vrot.slane %v2510, 1
    %v2512 = vadd.f32 %v2510, %v2511
    %v2513 = vrot.slane %v2371, 4
    %v2514 = vadd.f32 %v2371, %v2513
    %v2515 = vrot.slane %v2514, 2
    %v2516 = vadd.f32 %v2514, %v2515
    %v2517 = vrot.slane %v2516, 1
    %v2518 = vadd.f32 %v2516, %v2517
    %v2519 = vrot.slane %v2372, 4
    %v2520 = vadd.f32 %v2372, %v2519
    %v2521 = vrot.slane %v2520, 2
    %v2522 = vadd.f32 %v2520, %v2521
    %v2523 = vrot.slane %v2522, 1
    %v2524 = vadd.f32 %v2522, %v2523
    %v2525 = vrot.slane %v2373, 4
    %v2526 = vadd.f32 %v2373, %v2525
    %v2527 = vrot.slane %v2526, 2
    %v2528 = vadd.f32 %v2526, %v2527
    %v2529 = vrot.slane %v2528, 1
    %v2530 = vadd.f32 %v2528, %v2529
    %v2531 = vrot.slane %v2374, 4
    %v2532 = vadd.f32 %v2374, %v2531
    %v2533 = vrot.slane %v2532, 2
    %v2534 = vadd.f32 %v2532, %v2533
    %v2535 = vrot.slane %v2534, 1
    %v2536 = vadd.f32 %v2534, %v2535
    %v2537 = vrot.slane %v2375, 4
    %v2538 = vadd.f32 %v2375, %v2537
    %v2539 = vrot.slane %v2538, 2
    %v2540 = vadd.f32 %v2538, %v2539
    %v2541 = vrot.slane %v2540, 1
    %v2542 = vadd.f32 %v2540, %v2541
    %v2543 = vrot.slane %v2376, 4
    %v2544 = vadd.f32 %v2376, %v2543
    %v2545 = vrot.slane %v2544, 2
    %v2546 = vadd.f32 %v2544, %v2545
    %v2547 = vrot.slane %v2546, 1
    %v2548 = vadd.f32 %v2546, %v2547
    %v2549 = vrot.slane %v2377, 4
    %v2550 = vadd.f32 %v2377, %v2549
    %v2551 = vrot.slane %v2550, 2
    %v2552 = vadd.f32 %v2550, %v2551
    %v2553 = vrot.slane %v2552, 1
    %v2554 = vadd.f32 %v2552, %v2553
    %v2555 = vrot.slane %v2378, 4
    %v2556 = vadd.f32 %v2378, %v2555
    %v2557 = vrot.slane %v2556, 2
    %v2558 = vadd.f32 %v2556, %v2557
    %v2559 = vrot.slane %v2558, 1
    %v2560 = vadd.f32 %v2558, %v2559
    %v2561 = vrot.slane %v2379, 4
    %v2562 = vadd.f32 %v2379, %v2561
    %v2563 = vrot.slane %v2562, 2
    %v2564 = vadd.f32 %v2562, %v2563
    %v2565 = vrot.slane %v2564, 1
    %v2566 = vadd.f32 %v2564, %v2565
    %v2567 = vrot.slane %v2380, 4
    %v2568 = vadd.f32 %v2380, %v2567
    %v2569 = vrot.slane %v2568, 2
    %v2570 = vadd.f32 %v2568, %v2569
    %v2571 = vrot.slane %v2570, 1
    %v2572 = vadd.f32 %v2570, %v2571
    %vm2573 = vcmp.gt.f32.partialorder %v2386, 0.0
    %vm2574 = vcmp.gt.f32.partialorder %v2392, 0.0
    %vm2575 = vcmp.gt.f32.partialorder %v2398, 0.0
    %vm2576 = vcmp.gt.f32.partialorder %v2404, 0.0
    %vm2577 = vcmp.gt.f32.partialorder %v2410, 0.0
    %vm2578 = vcmp.gt.f32.partialorder %v2416, 0.0
    %vm2579 = vcmp.gt.f32.partialorder %v2422, 0.0
    %vm2580 = vcmp.gt.f32.partialorder %v2428, 0.0
    %vm2581 = vcmp.gt.f32.partialorder %v2434, 0.0
    %vm2582 = vcmp.gt.f32.partialorder %v2440, 0.0
    %vm2583 = vcmp.gt.f32.partialorder %v2446, 0.0
    %vm2584 = vcmp.gt.f32.partialorder %v2452, 0.0
    %vm2585 = vcmp.gt.f32.partialorder %v2458, 0.0
    %vm2586 = vcmp.gt.f32.partialorder %v2464, 0.0
    %vm2587 = vcmp.gt.f32.partialorder %v2470, 0.0
    %vm2588 = vcmp.gt.f32.partialorder %v2476, 0.0
    %vm2589 = vcmp.gt.f32.partialorder %v2482, 0.0
    %vm2590 = vcmp.gt.f32.partialorder %v2488, 0.0
    %vm2591 = vcmp.gt.f32.partialorder %v2494, 0.0
    %vm2592 = vcmp.gt.f32.partialorder %v2500, 0.0
    %vm2593 = vcmp.gt.f32.partialorder %v2506, 0.0
    %vm2594 = vcmp.gt.f32.partialorder %v2512, 0.0
    %vm2595 = vcmp.gt.f32.partialorder %v2518, 0.0
    %vm2596 = vcmp.gt.f32.partialorder %v2524, 0.0
    %vm2597 = vcmp.gt.f32.partialorder %v2530, 0.0
    %vm2598 = vcmp.gt.f32.partialorder %v2536, 0.0
    %vm2599 = vcmp.gt.f32.partialorder %v2542, 0.0
    %vm2600 = vcmp.gt.f32.partialorder %v2548, 0.0
    %vm2601 = vcmp.gt.f32.partialorder %v2554, 0.0
    %vm2602 = vcmp.gt.f32.partialorder %v2560, 0.0
    %vm2603 = vcmp.gt.f32.partialorder %v2566, 0.0
    %vm2604 = vcmp.gt.f32.partialorder %v2572, 0.0
    %v2605 = vsel %vm2573, 1.0, -1.0
    %v2606 = vsel %vm2574, 1.0, -1.0
    %v2607 = vsel %vm2575, 1.0, -1.0
    %v2608 = vsel %vm2576, 1.0, -1.0
    %v2609 = vsel %vm2577, 1.0, -1.0
    %v2610 = vsel %vm2578, 1.0, -1.0
    %v2611 = vsel %vm2579, 1.0, -1.0
    %v2612 = vsel %vm2580, 1.0, -1.0
    %v2613 = vsel %vm2581, 1.0, -1.0
    %v2614 = vsel %vm2582, 1.0, -1.0
    %v2615 = vsel %vm2583, 1.0, -1.0
    %v2616 = vsel %vm2584, 1.0, -1.0
    %v2617 = vsel %vm2585, 1.0, -1.0
    %v2618 = vsel %vm2586, 1.0, -1.0
    %v2619 = vsel %vm2587, 1.0, -1.0
    %v2620 = vsel %vm2588, 1.0, -1.0
    %v2621 = vsel %vm2589, 1.0, -1.0
    %v2622 = vsel %vm2590, 1.0, -1.0
    %v2623 = vsel %vm2591, 1.0, -1.0
    %v2624 = vsel %vm2592, 1.0, -1.0
    %v2625 = vsel %vm2593, 1.0, -1.0
    %v2626 = vsel %vm2594, 1.0, -1.0
    %v2627 = vsel %vm2595, 1.0, -1.0
    %v2628 = vsel %vm2596, 1.0, -1.0
    %v2629 = vsel %vm2597, 1.0, -1.0
    %v2630 = vsel %vm2598, 1.0, -1.0
    %v2631 = vsel %vm2599, 1.0, -1.0
    %v2632 = vsel %vm2600, 1.0, -1.0
    %v2633 = vsel %vm2601, 1.0, -1.0
    %v2634 = vsel %vm2602, 1.0, -1.0
    %v2635 = vsel %vm2603, 1.0, -1.0
    %v2636 = vsel %vm2604, 1.0, -1.0
    %vm2669 = vcmask 1041409
    %v2670 = vsel %vm2669, %v2607, %v2605
    %vm2671 = vcmask 1042434
    %v2672 = vsel %vm2671, %v2609, %v2670
    %vm2673 = vcmask 1043459
    %v2674 = vsel %vm2673, %v2611, %v2672
    %vm2675 = vcmask 1044484
    %v2676 = vsel %vm2675, %v2613, %v2674
    %vm2677 = vcmask 1045509
    %v2678 = vsel %vm2677, %v2615, %v2676
    %vm2679 = vcmask 1046534
    %v2680 = vsel %vm2679, %v2617, %v2678
    %vm2681 = vcmask 1047559
    %v2682 = vsel %vm2681, %v2619, %v2680
    %v2683 = vsel %vm2669, %v2608, %v2606
    %v2684 = vsel %vm2671, %v2610, %v2683
    %v2685 = vsel %vm2673, %v2612, %v2684
    %v2686 = vsel %vm2675, %v2614, %v2685
    %v2687 = vsel %vm2677, %v2616, %v2686
    %v2688 = vsel %vm2679, %v2618, %v2687
    %v2689 = vsel %vm2681, %v2620, %v2688
    %v2690 = vsel %vm2669, %v2623, %v2621
    %v2691 = vsel %vm2671, %v2625, %v2690
    %v2692 = vsel %vm2673, %v2627, %v2691
    %v2693 = vsel %vm2675, %v2629, %v2692
    %v2694 = vsel %vm2677, %v2631, %v2693
    %v2695 = vsel %vm2679, %v2633, %v2694
    %v2696 = vsel %vm2681, %v2635, %v2695
    %v2697 = vsel %vm2669, %v2624, %v2622
    %v2698 = vsel %vm2671, %v2626, %v2697
    %v2699 = vsel %vm2673, %v2628, %v2698
    %v2700 = vsel %vm2675, %v2630, %v2699
    %v2701 = vsel %vm2677, %v2632, %v2700
    %v2702 = vsel %vm2679, %v2634, %v2701
    %v2703 = vsel %vm2681, %v2636, %v2702
    %2708 = vst [vmem:[#allocation8] sm:$0xff] %v2682
    %2709 = vst [vmem:[#allocation8 + $0x8] sm:$0xff] %v2689
    %2710 = vst [vmem:[#allocation8 + $0x10] sm:$0xff] %v2696
    %2711 = vst [vmem:[#allocation8 + $0x18] sm:$0xff] %v2703
    // Predicated region
    $region26: #{tpu_custom_call.1} parent=1 // pred_check
      _
    $region27: #{tpu_custom_call.1} parent=1 // pred_check_branch
      %2713 = sbr.rel (0) target = $region29
    $region28: #{tpu_custom_call.1} parent=1 // pred_region
      %s2715 = ssub.s32 512, 512
      %2716 = vsyncadd [#allocation4], %s2715
      %s2717 = sshll.u32 [#allocation8], 4
      %s2718 = int_to_ptr.vmem [resolvable:$true] %s2717
      %2723 = dma.vmem_to_hbm [thread:$0]  %s2718, 512, %s3, [#allocation4], 256, 256, 16
    $region29: #{tpu_custom_call.1} parent=1 // pred_fallthru
      _
    // Predicated region
    $region30: #{tpu_custom_call.1} parent=1 // pred_check
      _
    $region31: #{tpu_custom_call.1} parent=1 // pred_check_branch
      %2725 = sbr.rel (0) target = $region33
    $region32: #{tpu_custom_call.1} parent=1 // pred_region
      %2726 = dma.done [#allocation4], 512
    $region33: #{tpu_custom_call.1} parent=1 // pred_fallthru
      _
    %2727 = vsyncpa [#allocation3], 1
    %2728 = vsyncpa [#allocation6], 1
    %2729 = vsyncpa [#allocation4], 1

</llo_original>
